<compile_context>
chip_gen: v7x
topology: tpu7x:2x2x1
jax: 0.10.0
libtpu: 0.0.40
codegen_flags: <defaults>
</compile_context>

<pallas_src>
import functools

import jax
import jax.numpy as jnp
from jax.experimental import pallas as pl
from jax.experimental.pallas import tpu as pltpu


C1, C2, C3 = 1024, 512, 256          # layer input widths
NC_PAD = 128                         # padded (lane-dense) class dimension
TB = 8                               # batch tile (f32 sublane multiple)


def _classifier_kernel(x_ref, w1_ref, w2_ref, w3_ref, tvec_ref, o_ref):
    # Packed per-channel vectors: [t1 (512) | t2 (256) | b3 (128)], f32.
    t1 = tvec_ref[:, 0:C2]
    t2 = tvec_ref[:, C2:C2 + C3]
    b3 = tvec_ref[:, C2 + C3:C2 + C3 + NC_PAD]

    # fc1: Linear (BN scale pre-folded into w1) + shift + ReLU   (MXU bf16, f32 acc)
    x = x_ref[...].astype(jnp.bfloat16)
    h1 = jnp.dot(x, w1_ref[...], preferred_element_type=jnp.float32)
    h1 = jnp.maximum(h1 + t1, 0.0)

    # fc2: Linear (BN folded) + shift + ReLU
    h2 = jnp.dot(h1.astype(jnp.bfloat16), w2_ref[...],
                 preferred_element_type=jnp.float32)
    h2 = jnp.maximum(h2 + t2, 0.0)

    # fc3: Linear only (class dim padded to 128 lanes)
    out = jnp.dot(h2.astype(jnp.bfloat16), w3_ref[...],
                  preferred_element_type=jnp.float32) + b3
    o_ref[...] = out.astype(o_ref.dtype)


@functools.partial(jax.jit, static_argnames=("num_classes",))
def pointnet2_cls_classifier(feat, params, *, num_classes=40):
    """feat: (B, 1024) float32 -> logits (B, num_classes) float32."""
    B = feat.shape[0]

    # Pad batch to a multiple of the batch tile (odd B handled transparently).
    Bp = pl.cdiv(B, TB) * TB
    if Bp != B:
        feat = jnp.pad(feat, ((0, Bp - B), (0, 0)))

    flops = 2 * Bp * (C1 * C2 + C2 * C3 + C3 * NC_PAD)
    bytes_accessed = (
        (C1 * C2 + C2 * C3 + C3 * NC_PAD) * 2        # bf16 weights
        + Bp * C1 * 4                                 # feat
        + (C2 + C3 + NC_PAD) * 4                      # packed shift/bias vector
        + Bp * NC_PAD * 4                             # logits
    )

    logits = pl.pallas_call(
        _classifier_kernel,
        out_shape=jax.ShapeDtypeStruct((Bp, NC_PAD), jnp.float32),
        grid_spec=pltpu.PrefetchScalarGridSpec(
            num_scalar_prefetch=0,
            grid=(Bp // TB,),
            in_specs=[
                pl.BlockSpec((TB, C1), lambda i: (i, 0)),               # feat tile
                pl.BlockSpec((C1, C2), lambda i: (0, 0)),               # w1 (resident)
                pl.BlockSpec((C2, C3), lambda i: (0, 0)),               # w2 (resident)
                pl.BlockSpec((C3, NC_PAD), lambda i: (0, 0)),           # w3 (resident)
                pl.BlockSpec((1, C2 + C3 + NC_PAD), lambda i: (0, 0)),  # packed t/b
            ],
            out_specs=pl.BlockSpec((TB, NC_PAD), lambda i: (i, 0)),
        ),
        compiler_params=pltpu.CompilerParams(
            dimension_semantics=("parallel",),
            vmem_limit_bytes=16 << 20,
        ),
        cost_estimate=pl.CostEstimate(
            flops=flops, transcendentals=0, bytes_accessed=bytes_accessed),
    )(feat, params["w1"], params["w2"], params["w3"], params["tvec"])

    return logits[:B, :num_classes]


def _fold_bn(gamma, beta, mean, var, eps=1e-5):
    s = gamma / jnp.sqrt(var + eps)
    t = beta - mean * s
    return s, t


def make_params(key, num_classes=40):
    """Deterministic synthetic parameters matching the module's shapes.

    Returns (kernel_params, ref_params): kernel_params has BN fully folded into
    bf16 weights + one packed f32 shift vector; ref_params keeps f32 copies for
    the correctness check.
    """
    ks = jax.random.split(key, 16)

    def lin(kw, kb, fan_in, fan_out):
        # PyTorch Linear stores weight as (out, in); we pre-transpose to (in, out).
        bound = 1.0 / jnp.sqrt(fan_in)
        w = jax.random.uniform(kw, (fan_in, fan_out), jnp.float32, -bound, bound)
        b = jax.random.uniform(kb, (1, fan_out), jnp.float32, -bound, bound)
        return w, b

    def bn(kg, kb, km, kv, c):
        gamma = 1.0 + 0.1 * jax.random.normal(kg, (1, c), jnp.float32)
        beta = 0.1 * jax.random.normal(kb, (1, c), jnp.float32)
        mean = 0.1 * jax.random.normal(km, (1, c), jnp.float32)
        var = jnp.abs(1.0 + 0.1 * jax.random.normal(kv, (1, c), jnp.float32))
        return gamma, beta, mean, var

    w1, b1 = lin(ks[0], ks[1], C1, C2)
    w2, b2 = lin(ks[2], ks[3], C2, C3)
    w3, b3 = lin(ks[4], ks[5], C3, num_classes)

    g1, be1, m1, v1 = bn(ks[6], ks[7], ks[8], ks[9], C2)
    g2, be2, m2, v2 = bn(ks[10], ks[11], ks[12], ks[13], C3)

    # Fold BN completely into the linear layers:
    #   BN(x @ W + b) = x @ (W * s) + (b * s + t)
    s1, t1 = _fold_bn(g1, be1, m1, v1)
    s2, t2 = _fold_bn(g2, be2, m2, v2)
    w1f = w1 * s1
    t1f = b1 * s1 + t1
    w2f = w2 * s2
    t2f = b2 * s2 + t2

    # Pad the class dimension 40 -> 128 lanes (lane-dense output store).
    w3p = jnp.zeros((C3, NC_PAD), jnp.float32).at[:, :num_classes].set(w3)
    b3p = jnp.zeros((1, NC_PAD), jnp.float32).at[:, :num_classes].set(b3)

    # Pack the small per-channel vectors into a single (1, 896) f32 array.
    tvec = jnp.concatenate([t1f, t2f, b3p], axis=1)

    kernel_params = {
        "w1": w1f.astype(jnp.bfloat16),
        "w2": w2f.astype(jnp.bfloat16),
        "w3": w3p.astype(jnp.bfloat16),
        "tvec": tvec,
    }
    ref_params = {
        "w1": w1f, "t1": t1f,
        "w2": w2f, "t2": t2f,
        "w3": w3p, "b3": b3p,
    }
    return kernel_params, ref_params


def _reference(feat, p):
    h1 = jnp.maximum(feat @ p["w1"] + p["t1"], 0.0)
    h2 = jnp.maximum(h1 @ p["w2"] + p["t2"], 0.0)
    return h2 @ p["w3"] + p["b3"]


if __name__ == "__main__":
    key = jax.random.PRNGKey(0)
    k_feat, k_params = jax.random.split(key)

    B, NUM_CLASSES = 16, 40
    feat = jax.random.normal(k_feat, (B, C1), jnp.float32)
    kernel_params, ref_params = make_params(k_params, NUM_CLASSES)

    logits = pointnet2_cls_classifier(feat, kernel_params, num_classes=NUM_CLASSES)
    logits = jax.block_until_ready(logits)

    ref = _reference(feat, ref_params)[:, :NUM_CLASSES]
    assert logits.shape == (B, NUM_CLASSES), logits.shape
    # Kernel uses bf16 weights vs. the f32 reference -> relaxed tolerance.
    assert jnp.allclose(logits, ref, atol=2e-2, rtol=2e-2), (
        float(jnp.max(jnp.abs(logits - ref))))

    print("KERNEL_OK")
</pallas_src>

<mosaic_0001>
module attributes {stable_mosaic.version = 11 : i64} {
  func.func @_classifier_kernel(%arg0: i32, %arg1: memref<8x1024xf32, #tpu.memory_space<vmem>>, %arg2: memref<1024x512xbf16, #tpu.memory_space<vmem>>, %arg3: memref<512x256xbf16, #tpu.memory_space<vmem>>, %arg4: memref<256x128xbf16, #tpu.memory_space<vmem>>, %arg5: memref<1x896xf32, #tpu.memory_space<vmem>>, %arg6: memref<8x128xf32, #tpu.memory_space<vmem>>) attributes {dimension_semantics = [#tpu.dimension_semantics<parallel>], iteration_bounds = array<i64: 2>, scalar_prefetch = 0 : i64, scratch_operands = 0 : i64, tpu.core_type = #tpu.core_type<tc>, window_params = [{transform_indices = @transform_0, window_bounds = array<i64: 8, 1024>}, {pipeline_mode = #tpu.pipeline_mode<synchronous>, transform_indices = @transform_1, window_bounds = array<i64: 1024, 512>}, {pipeline_mode = #tpu.pipeline_mode<synchronous>, transform_indices = @transform_2, window_bounds = array<i64: 512, 256>}, {pipeline_mode = #tpu.pipeline_mode<synchronous>, transform_indices = @transform_3, window_bounds = array<i64: 256, 128>}, {pipeline_mode = #tpu.pipeline_mode<synchronous>, transform_indices = @transform_4, window_bounds = array<i64: 1, 896>}, {transform_indices = @transform_5, window_bounds = array<i64: 8, 128>}]} {
    %c0 = arith.constant 0 : index
    %c0_0 = arith.constant 0 : index
    %0 = vector.load %arg5[%c0, %c0_0] : memref<1x896xf32, #tpu.memory_space<vmem>>, vector<1x512xf32>
    %c0_1 = arith.constant 0 : index
    %c512 = arith.constant 512 : index
    %1 = vector.load %arg5[%c0_1, %c512] : memref<1x896xf32, #tpu.memory_space<vmem>>, vector<1x256xf32>
    %c0_2 = arith.constant 0 : index
    %c768 = arith.constant 768 : index
    %2 = vector.load %arg5[%c0_2, %c768] : memref<1x896xf32, #tpu.memory_space<vmem>>, vector<1x128xf32>
    %c0_3 = arith.constant 0 : index
    %c0_4 = arith.constant 0 : index
    %3 = vector.load %arg1[%c0_3, %c0_4] : memref<8x1024xf32, #tpu.memory_space<vmem>>, vector<8x1024xf32>
    %4 = arith.truncf %3 : vector<8x1024xf32> to vector<8x1024xbf16>
    %c0_5 = arith.constant 0 : index
    %c0_6 = arith.constant 0 : index
    %5 = vector.load %arg2[%c0_5, %c0_6] : memref<1024x512xbf16, #tpu.memory_space<vmem>>, vector<1024x512xbf16>
    %cst = arith.constant dense<0.000000e+00> : vector<8x512xf32>
    %6 = tpu.matmul %4, %5, %cst {dimension_numbers = #tpu.dot_dimension_numbers<[1], [0], [0], [1], [0, 0, 1, 1], [], []>} : vector<8x1024xbf16>, vector<1024x512xbf16>, vector<8x512xf32> -> vector<8x512xf32>
    %7 = vector.broadcast %0 : vector<1x512xf32> to vector<8x512xf32>
    %8 = arith.addf %6, %7 : vector<8x512xf32>
    %cst_7 = arith.constant 0.000000e+00 : f32
    %9 = vector.broadcast %cst_7 : f32 to vector<8x512xf32>
    %10 = arith.maximumf %8, %9 : vector<8x512xf32>
    %11 = arith.truncf %10 : vector<8x512xf32> to vector<8x512xbf16>
    %c0_8 = arith.constant 0 : index
    %c0_9 = arith.constant 0 : index
    %12 = vector.load %arg3[%c0_8, %c0_9] : memref<512x256xbf16, #tpu.memory_space<vmem>>, vector<512x256xbf16>
    %cst_10 = arith.constant dense<0.000000e+00> : vector<8x256xf32>
    %13 = tpu.matmul %11, %12, %cst_10 {dimension_numbers = #tpu.dot_dimension_numbers<[1], [0], [0], [1], [0, 0, 1, 1], [], []>} : vector<8x512xbf16>, vector<512x256xbf16>, vector<8x256xf32> -> vector<8x256xf32>
    %14 = vector.broadcast %1 : vector<1x256xf32> to vector<8x256xf32>
    %15 = arith.addf %13, %14 : vector<8x256xf32>
    %cst_11 = arith.constant 0.000000e+00 : f32
    %16 = vector.broadcast %cst_11 : f32 to vector<8x256xf32>
    %17 = arith.maximumf %15, %16 : vector<8x256xf32>
    %18 = arith.truncf %17 : vector<8x256xf32> to vector<8x256xbf16>
    %c0_12 = arith.constant 0 : index
    %c0_13 = arith.constant 0 : index
    %19 = vector.load %arg4[%c0_12, %c0_13] : memref<256x128xbf16, #tpu.memory_space<vmem>>, vector<256x128xbf16>
    %cst_14 = arith.constant dense<0.000000e+00> : vector<8x128xf32>
    %20 = tpu.matmul %18, %19, %cst_14 {dimension_numbers = #tpu.dot_dimension_numbers<[1], [0], [0], [1], [0, 0, 1, 1], [], []>} : vector<8x256xbf16>, vector<256x128xbf16>, vector<8x128xf32> -> vector<8x128xf32>
    %21 = vector.broadcast %2 : vector<1x128xf32> to vector<8x128xf32>
    %22 = arith.addf %20, %21 : vector<8x128xf32>
    %c0_15 = arith.constant 0 : index
    %c0_16 = arith.constant 0 : index
    %23 = vector.load %arg6[%c0_15, %c0_16] : memref<8x128xf32, #tpu.memory_space<vmem>>, vector<8x128xf32>
    tpu.vector_store %arg6[%c0_15, %c0_16], %22 {strides = array<i32>} : memref<8x128xf32, #tpu.memory_space<vmem>>, vector<8x128xf32>,
    return
  }
  func.func @transform_0(%arg0: i32) -> (i32, i32) {
    %c0_i32 = arith.constant 0 : i32
    %c0_i32_0 = arith.constant 0 : i32
    return %arg0, %c0_i32 : i32, i32
  }
  func.func @transform_1(%arg0: i32) -> (i32, i32) {
    %c0_i32 = arith.constant 0 : i32
    %c0_i32_0 = arith.constant 0 : i32
    %c0_i32_1 = arith.constant 0 : i32
    return %c0_i32, %c0_i32_0 : i32, i32
  }
  func.func @transform_2(%arg0: i32) -> (i32, i32) {
    %c0_i32 = arith.constant 0 : i32
    %c0_i32_0 = arith.constant 0 : i32
    %c0_i32_1 = arith.constant 0 : i32
    return %c0_i32, %c0_i32_0 : i32, i32
  }
  func.func @transform_3(%arg0: i32) -> (i32, i32) {
    %c0_i32 = arith.constant 0 : i32
    %c0_i32_0 = arith.constant 0 : i32
    %c0_i32_1 = arith.constant 0 : i32
    return %c0_i32, %c0_i32_0 : i32, i32
  }
  func.func @transform_4(%arg0: i32) -> (i32, i32) {
    %c0_i32 = arith.constant 0 : i32
    %c0_i32_0 = arith.constant 0 : i32
    %c0_i32_1 = arith.constant 0 : i32
    return %c0_i32, %c0_i32_0 : i32, i32
  }
  func.func @transform_5(%arg0: i32) -> (i32, i32) {
    %c0_i32 = arith.constant 0 : i32
    %c0_i32_0 = arith.constant 0 : i32
    return %arg0, %c0_i32 : i32, i32
  }
}

</mosaic_0001>

<llo_original>
// kernel: pointnet2_cls_classifier.1
$region0: #{pointnet2_cls_classifier.1}
  #allocation0 [shape = 'u32[]', space=smem, size = 0x4, offset = 0x4, fixed_abs, tag = 'smem constant byte address 0x4 - core index']
  #allocation1 [shape = 'u32[144,128]{1,0:T(1,128)}', space=vmem, size = 0x12000, scoped, tag = 'internal scratch']
  %s0 = inlined_call_operand.hbm [shape: f32[16,1024], index: 0, kind: input, shape index: {}]
  %s1 = inlined_call_operand.hbm [shape: bf16[1024,512], index: 1, kind: input, shape index: {}]
  %s2 = inlined_call_operand.hbm [shape: bf16[512,256], index: 2, kind: input, shape index: {}]
  %s3 = inlined_call_operand.hbm [shape: bf16[256,128], index: 3, kind: input, shape index: {}]
  %s4 = inlined_call_operand.hbm [shape: f32[1,896], index: 4, kind: input, shape index: {}]
  %s5 = inlined_call_operand.hbm [shape: f32[16,128], index: 5, kind: output, shape index: {}]
  %s6 = sld [smem:[#allocation0]]
  $region73: #{pointnet2_cls_classifier.1} parent=0
    _
  %s8 = ssub.s32 1, %s6
  %s9 = scalar_select 0, %s8, %s6
  $region1: #{pointnet2_cls_classifier.1} parent=0
    #allocation2 [shape = 'u8[65536]{0}', space=vmem, size = 0x10000, scoped, tag = 'input window, operand 0']
    #allocation3 [shape = 's32[2]{0}', space=sflag, size = 0x8, scoped, tag = 'scoped memory for pointnet2_cls_classifier.1']
    #allocation4 [shape = 's32[2]{0}', space=sflag, size = 0x8, scoped, tag = 'scoped memory for pointnet2_cls_classifier.1']
    #allocation5 [shape = 'u8[1048576]{0}', space=vmem, size = 0x100000, scoped, tag = 'input window, operand 1, single buffered']
    #allocation6 [shape = 's32[1]{0}', space=sflag, size = 0x4, scoped, tag = 'scoped memory for pointnet2_cls_classifier.1']
    #allocation7 [shape = 'u8[262144]{0}', space=vmem, size = 0x40000, scoped, tag = 'input window, operand 2, single buffered']
    #allocation8 [shape = 'u8[65536]{0}', space=vmem, size = 0x10000, scoped, tag = 'input window, operand 3, single buffered']
    #allocation9 [shape = 's32[1]{0}', space=sflag, size = 0x4, scoped, tag = 'scoped memory for pointnet2_cls_classifier.1']
    #allocation10 [shape = 'u8[3584]{0}', space=vmem, size = 0x1000, scoped, tag = 'input window, operand 4, single buffered']
    #allocation11 [shape = 'u8[8192]{0}', space=vmem, size = 0x2000, scoped, tag = 'output window, operand 0']
    %10 = vsyncpa [#allocation3], 0
    %s11 = scalar_lea.sflag [#allocation3], 1
    %12 = vsyncpa %s11, 0
    %13 = vsyncpa [#allocation6], 0
    %14 = vsyncpa [#allocation9], 0
    %15 = vsyncpa [#allocation4], 0
    %s16 = scalar_lea.sflag [#allocation4], 1
    %17 = vsyncpa %s16, 0
    loop: start=0, step=1, limit=4
    $region2: #{pointnet2_cls_classifier.1} parent=1 // loop_pre_header
      _
    $region3: #{pointnet2_cls_classifier.1} parent=1 // loop_header
      %s19 = sphi 0, %s23
      %p20 = scmp.ge.s32.totalorder %s19, 4
      %s29 = sphi 0, %s31
      %s32 = sphi 0, %s29
      %s33 = sphi 0, %s32
      %s49 = sphi 0, %s33
      %s53 = sphi 0, %s53
      %s55 = sphi 0, %s53
      %s56 = sphi 0, %s55
      %s70 = sphi 0, %s56
      %s74 = sphi 0, %s74
      %s76 = sphi 0, %s74
      %s77 = sphi 0, %s76
      %s91 = sphi 0, %s77
      %s95 = sphi 0, %s95
      %s97 = sphi 0, %s95
      %s98 = sphi 0, %s97
      %s112 = sphi 0, %s98
      %s116 = sphi 0, %s116
      %s118 = sphi 0, %s116
      %s119 = sphi 0, %s118
      %s133 = sphi 0, %s119
      %s139 = sphi 0, %s141
      %s142 = sphi 0, %s139
      %s143 = sphi 0, %s142
      %s159 = sphi 0, %s143
    $region4: #{pointnet2_cls_classifier.1} parent=1 // loop_header_branch
      %22 = sbr.rel (%p20) target = $region8
    $region5: #{pointnet2_cls_classifier.1} parent=1 // loop_body
      %s24 = ssub.s32 %s19, 1
      %s25 = ssub.s32 %s19, 2
      %s26 = sadd.s32 %s19, 1
      %s27 = ssub.s32 %s19, %s26
      %p28 = scmp.eq.s32.totalorder %s27, 0
      %s30 = sadd.s32 %s29, 1
      %s31 = scalar_select %p28, %s29, %s30
      %p34 = pneg %p28
      %p35 = scmp.eq.s32.totalorder %s19, 1
      %p36 = por %p34, %p35
      %p37 = scmp.ne.s32.totalorder %s29, %s32
      %p38 = scmp.eq.s32.totalorder %s19, 0
      %p39 = por %p37, %p38
      %p40 = scmp.ne.s32.totalorder %s29, %s32
      %p41 = scmp.eq.s32.totalorder %s24, 1
      %p42 = por %p40, %p41
      %p43 = scmp.ne.s32.totalorder %s32, %s33
      %p44 = scmp.eq.s32.totalorder %s24, 0
      %p45 = por %p43, %p44
      %p46 = scmp.ne.s32.totalorder %s32, %s33
      %p47 = scmp.eq.s32.totalorder %s25, 1
      %p48 = por %p46, %p47
      %p50 = scmp.ne.s32.totalorder %s33, %s49
      %p51 = scmp.eq.s32.totalorder %s25, 0
      %p52 = por %p50, %p51
      %s54 = sadd.s32 %s53, 1
      %p57 = scmp.eq.s32.totalorder %s19, 1
      %p58 = scmp.ne.s32.totalorder %s53, %s55
      %p59 = scmp.eq.s32.totalorder %s19, 0
      %p60 = por %p58, %p59
      %p61 = scmp.ne.s32.totalorder %s53, %s55
      %p62 = scmp.eq.s32.totalorder %s24, 1
      %p63 = por %p61, %p62
      %p64 = scmp.ne.s32.totalorder %s55, %s56
      %p65 = scmp.eq.s32.totalorder %s24, 0
      %p66 = por %p64, %p65
      %p67 = scmp.ne.s32.totalorder %s55, %s56
      %p68 = scmp.eq.s32.totalorder %s25, 1
      %p69 = por %p67, %p68
      %p71 = scmp.ne.s32.totalorder %s56, %s70
      %p72 = scmp.eq.s32.totalorder %s25, 0
      %p73 = por %p71, %p72
      %s75 = sadd.s32 %s74, 1
      %p78 = scmp.eq.s32.totalorder %s19, 1
      %p79 = scmp.ne.s32.totalorder %s74, %s76
      %p80 = scmp.eq.s32.totalorder %s19, 0
      %p81 = por %p79, %p80
      %p82 = scmp.ne.s32.totalorder %s74, %s76
      %p83 = scmp.eq.s32.totalorder %s24, 1
      %p84 = por %p82, %p83
      %p85 = scmp.ne.s32.totalorder %s76, %s77
      %p86 = scmp.eq.s32.totalorder %s24, 0
      %p87 = por %p85, %p86
      %p88 = scmp.ne.s32.totalorder %s76, %s77
      %p89 = scmp.eq.s32.totalorder %s25, 1
      %p90 = por %p88, %p89
      %p92 = scmp.ne.s32.totalorder %s77, %s91
      %p93 = scmp.eq.s32.totalorder %s25, 0
      %p94 = por %p92, %p93
      %s96 = sadd.s32 %s95, 1
      %p99 = scmp.eq.s32.totalorder %s19, 1
      %p100 = scmp.ne.s32.totalorder %s95, %s97
      %p101 = scmp.eq.s32.totalorder %s19, 0
      %p102 = por %p100, %p101
      %p103 = scmp.ne.s32.totalorder %s95, %s97
      %p104 = scmp.eq.s32.totalorder %s24, 1
      %p105 = por %p103, %p104
      %p106 = scmp.ne.s32.totalorder %s97, %s98
      %p107 = scmp.eq.s32.totalorder %s24, 0
      %p108 = por %p106, %p107
      %p109 = scmp.ne.s32.totalorder %s97, %s98
      %p110 = scmp.eq.s32.totalorder %s25, 1
      %p111 = por %p109, %p110
      %p113 = scmp.ne.s32.totalorder %s98, %s112
      %p114 = scmp.eq.s32.totalorder %s25, 0
      %p115 = por %p113, %p114
      %s117 = sadd.s32 %s116, 1
      %p120 = scmp.eq.s32.totalorder %s19, 1
      %p121 = scmp.ne.s32.totalorder %s116, %s118
      %p122 = scmp.eq.s32.totalorder %s19, 0
      %p123 = por %p121, %p122
      %p124 = scmp.ne.s32.totalorder %s116, %s118
      %p125 = scmp.eq.s32.totalorder %s24, 1
      %p126 = por %p124, %p125
      %p127 = scmp.ne.s32.totalorder %s118, %s119
      %p128 = scmp.eq.s32.totalorder %s24, 0
      %p129 = por %p127, %p128
      %p130 = scmp.ne.s32.totalorder %s118, %s119
      %p131 = scmp.eq.s32.totalorder %s25, 1
      %p132 = por %p130, %p131
      %p134 = scmp.ne.s32.totalorder %s119, %s133
      %p135 = scmp.eq.s32.totalorder %s25, 0
      %p136 = por %p134, %p135
      %s137 = ssub.s32 %s19, %s26
      %p138 = scmp.eq.s32.totalorder %s137, 0
      %s140 = sadd.s32 %s139, 1
      %s141 = scalar_select %p138, %s139, %s140
      %p144 = pneg %p138
      %p145 = scmp.eq.s32.totalorder %s19, 1
      %p146 = por %p144, %p145
      %p147 = scmp.ne.s32.totalorder %s139, %s142
      %p148 = scmp.eq.s32.totalorder %s19, 0
      %p149 = por %p147, %p148
      %p150 = scmp.ne.s32.totalorder %s139, %s142
      %p151 = scmp.eq.s32.totalorder %s24, 1
      %p152 = por %p150, %p151
      %p153 = scmp.ne.s32.totalorder %s142, %s143
      %p154 = scmp.eq.s32.totalorder %s24, 0
      %p155 = por %p153, %p154
      %p156 = scmp.ne.s32.totalorder %s142, %s143
      %p157 = scmp.eq.s32.totalorder %s25, 1
      %p158 = por %p156, %p157
      %p160 = scmp.ne.s32.totalorder %s143, %s159
      %p161 = scmp.eq.s32.totalorder %s25, 0
      %p162 = por %p160, %p161
      %p163 = scmp.le.s32.totalorder 1, %s19
      %p164 = scmp.lt.s32.totalorder %s19, 3
      %p165 = pnand %p163, %p164
      %p166 = pneg %p165
      // Predicated region
      $region9: #{pointnet2_cls_classifier.1} parent=5 // pred_check
        _
      $region10: #{pointnet2_cls_classifier.1} parent=5 // pred_check_branch
        %168 = sbr.rel (%p165) target = $region12
      $region11: #{pointnet2_cls_classifier.1} parent=5 // pred_region
        %s169 = ssub.s32 %s19, 1
        // Predicated region
        $region13: #{pointnet2_cls_classifier.1} parent=11 // pred_check
          %p170 = pneg %p66
        $region14: #{pointnet2_cls_classifier.1} parent=11 // pred_check_branch
          %172 = sbr.rel (%p170) target = $region16
        $region15: #{pointnet2_cls_classifier.1} parent=11 // pred_region
          %s174 = ssub.s32 32768, 32768
          %175 = vsyncadd [#allocation6], %s174
          %s176 = sshll.u32 [#allocation5], 4
          %s177 = int_to_ptr.vmem [resolvable:$true] %s176
          %182 = dma.hbm_to_vmem [thread:$0]  %s1, 32768, %s177, [#allocation6], 256, 256, 16
        $region16: #{pointnet2_cls_classifier.1} parent=11 // pred_fallthru
          _
        // Predicated region
        $region17: #{pointnet2_cls_classifier.1} parent=11 // pred_check
          %p183 = pneg %p87
        $region18: #{pointnet2_cls_classifier.1} parent=11 // pred_check_branch
          %185 = sbr.rel (%p183) target = $region20
        $region19: #{pointnet2_cls_classifier.1} parent=11 // pred_region
          %s187 = ssub.s32 8192, 8192
          %188 = vsyncadd [#allocation6], %s187
          %s189 = sshll.u32 [#allocation7], 4
          %s190 = int_to_ptr.vmem [resolvable:$true] %s189
          %195 = dma.hbm_to_vmem [thread:$0]  %s2, 8192, %s190, [#allocation6], 128, 128, 8
        $region20: #{pointnet2_cls_classifier.1} parent=11 // pred_fallthru
          _
        // Predicated region
        $region21: #{pointnet2_cls_classifier.1} parent=11 // pred_check
          %p196 = pneg %p108
        $region22: #{pointnet2_cls_classifier.1} parent=11 // pred_check_branch
          %198 = sbr.rel (%p196) target = $region24
        $region23: #{pointnet2_cls_classifier.1} parent=11 // pred_region
          %s200 = ssub.s32 2048, 2048
          %201 = vsyncadd [#allocation9], %s200
          %s202 = sshll.u32 [#allocation8], 4
          %s203 = int_to_ptr.vmem [resolvable:$true] %s202
          %208 = dma.hbm_to_vmem [thread:$0]  %s3, 2048, %s203, [#allocation9], 64, 64, 4
        $region24: #{pointnet2_cls_classifier.1} parent=11 // pred_fallthru
          _
        // Predicated region
        $region25: #{pointnet2_cls_classifier.1} parent=11 // pred_check
          %p209 = pneg %p129
        $region26: #{pointnet2_cls_classifier.1} parent=11 // pred_check_branch
          %211 = sbr.rel (%p209) target = $region28
        $region27: #{pointnet2_cls_classifier.1} parent=11 // pred_region
          %s213 = ssub.s32 112, 112
          %214 = vsyncadd [#allocation9], %s213
          %s216 = sshll.u32 [#allocation10], 4
          %s217 = int_to_ptr.vmem [resolvable:$true] %s216
          %219 = dma.hbm_to_vmem [thread:$0]  %s4, 112, %s217, [#allocation9]
        $region28: #{pointnet2_cls_classifier.1} parent=11 // pred_fallthru
          _
      $region12: #{pointnet2_cls_classifier.1} parent=5 // pred_fallthru
        _
      %p220 = scmp.lt.s32.totalorder %s19, 2
      // Predicated region
      $region29: #{pointnet2_cls_classifier.1} parent=5 // pred_check
        %p221 = pneg %p220
      $region30: #{pointnet2_cls_classifier.1} parent=5 // pred_check_branch
        %223 = sbr.rel (%p221) target = $region32
      $region31: #{pointnet2_cls_classifier.1} parent=5 // pred_region
        // Predicated region
        $region33: #{pointnet2_cls_classifier.1} parent=31 // pred_check
          %p224 = pneg %p39
        $region34: #{pointnet2_cls_classifier.1} parent=31 // pred_check_branch
          %226 = sbr.rel (%p224) target = $region36
        $region35: #{pointnet2_cls_classifier.1} parent=31 // pred_region
          %s227 = sand.u32 %s29, 1
          %s228 = scalar_lea.sflag [#allocation3], %s227
          %s229 = sand.u32 %s29, 1
          %s230 = smul.addr %s229, 64
          %s231 = scalar_lea.vmem [#allocation2], %s230
          %s233 = ssub.s32 1024, 1024
          %234 = vsyncadd %s228, %s233
          %s235 = smul.addr %s19, 8
          %s236 = smul.addr %s235, 128
          %s237 = scalar_lea.hbm %s0, %s236
          %s239 = sshll.u32 %s231, 4
          %s240 = int_to_ptr.vmem [resolvable:$true] %s239
          %242 = dma.hbm_to_vmem [thread:$0]  %s237, 1024, %s240, %s228
        $region36: #{pointnet2_cls_classifier.1} parent=31 // pred_fallthru
          _
      $region32: #{pointnet2_cls_classifier.1} parent=5 // pred_fallthru
        _
      %p243 = scmp.le.s32.totalorder 1, %s19
      %p244 = scmp.lt.s32.totalorder %s19, 3
      %p245 = pnand %p243, %p244
      %p246 = pneg %p245
      // Predicated region
      $region37: #{pointnet2_cls_classifier.1} parent=5 // pred_check
        _
      $region38: #{pointnet2_cls_classifier.1} parent=5 // pred_check_branch
        %248 = sbr.rel (%p245) target = $region40
      $region39: #{pointnet2_cls_classifier.1} parent=5 // pred_region
        %s249 = ssub.s32 %s19, 1
        %s250 = sand.u32 %s32, 1
        %s251 = scalar_lea.sflag [#allocation3], %s250
        %s252 = sand.u32 %s32, 1
        %s253 = smul.addr %s252, 64
        %s254 = scalar_lea.vmem [#allocation2], %s253
        // Predicated region
        $region41: #{pointnet2_cls_classifier.1} parent=39 // pred_check
          %p255 = pneg %p45
        $region42: #{pointnet2_cls_classifier.1} parent=39 // pred_check_branch
          %257 = sbr.rel (%p255) target = $region44
        $region43: #{pointnet2_cls_classifier.1} parent=39 // pred_region
          %258 = dma.done %s251, 1024
        $region44: #{pointnet2_cls_classifier.1} parent=39 // pred_fallthru
          _
        // Predicated region
        $region45: #{pointnet2_cls_classifier.1} parent=39 // pred_check
          %p259 = pneg %p66
        $region46: #{pointnet2_cls_classifier.1} parent=39 // pred_check_branch
          %261 = sbr.rel (%p259) target = $region48
        $region47: #{pointnet2_cls_classifier.1} parent=39 // pred_region
          %262 = dma.done [#allocation6], 32768
        $region48: #{pointnet2_cls_classifier.1} parent=39 // pred_fallthru
          _
        // Predicated region
        $region49: #{pointnet2_cls_classifier.1} parent=39 // pred_check
          %p263 = pneg %p87
        $region50: #{pointnet2_cls_classifier.1} parent=39 // pred_check_branch
          %265 = sbr.rel (%p263) target = $region52
        $region51: #{pointnet2_cls_classifier.1} parent=39 // pred_region
          %266 = dma.done [#allocation6], 8192
        $region52: #{pointnet2_cls_classifier.1} parent=39 // pred_fallthru
          _
        // Predicated region
        $region53: #{pointnet2_cls_classifier.1} parent=39 // pred_check
          %p267 = pneg %p108
        $region54: #{pointnet2_cls_classifier.1} parent=39 // pred_check_branch
          %269 = sbr.rel (%p267) target = $region56
        $region55: #{pointnet2_cls_classifier.1} parent=39 // pred_region
          %270 = dma.done [#allocation9], 2048
        $region56: #{pointnet2_cls_classifier.1} parent=39 // pred_fallthru
          _
        // Predicated region
        $region57: #{pointnet2_cls_classifier.1} parent=39 // pred_check
          %p271 = pneg %p129
        $region58: #{pointnet2_cls_classifier.1} parent=39 // pred_check_branch
          %273 = sbr.rel (%p271) target = $region60
        $region59: #{pointnet2_cls_classifier.1} parent=39 // pred_region
          %274 = dma.done [#allocation9], 112
        $region60: #{pointnet2_cls_classifier.1} parent=39 // pred_fallthru
          _
        %s275 = sand.u32 %s32, 1
        %s276 = scalar_lea.sflag [#allocation3], %s275
        %s277 = sand.u32 %s32, 1
        %s278 = smul.addr %s277, 64
        %s279 = scalar_lea.vmem [#allocation2], %s278
        %p280 = pneg %p45
        %p281 = pneg %p42
        %p282 = pneg %p66
        %p283 = pneg %p63
        %p284 = pneg %p87
        %p285 = pneg %p84
        %p286 = pneg %p108
        %p287 = pneg %p105
        %p288 = pneg %p129
        %p289 = pneg %p126
        %p290 = pneg %p155
        %p291 = pneg %p152
        %s292 = sand.u32 %s142, 1
        %s293 = scalar_lea.sflag [#allocation4], %s292
        %s294 = sand.u32 %s142, 1
        %s295 = smul.addr %s294, 8
        %s296 = scalar_lea.vmem [#allocation11], %s295
        %v298 = vld [vmem:[#allocation10] sm:$0xf]
        %v299 = vld [vmem:[#allocation10 + $0x4] sm:$0x3]
        %v300 = vld [vmem:[#allocation10 + $0x6] sm:$0x1]
        %v301 = vld [vmem:[%s254] sm:$0xff]
        %v302 = vld [vmem:[%s254 + $0x8] sm:$0xff]
        %v303 = vld [vmem:[%s254 + $0x10] sm:$0xff]
        %v304 = vld [vmem:[%s254 + $0x18] sm:$0xff]
        %v305 = vld [vmem:[%s254 + $0x20] sm:$0xff]
        %v306 = vld [vmem:[%s254 + $0x28] sm:$0xff]
        %v307 = vld [vmem:[%s254 + $0x30] sm:$0xff]
        %v308 = vld [vmem:[%s254 + $0x38] sm:$0xff]
        %v309 = vpack.c.bf16 %v301, %v301
        %v310 = vpack.c.bf16 %v302, %v302
        %v311 = vpack.c.bf16 %v303, %v303
        %v312 = vpack.c.bf16 %v304, %v304
        %v313 = vpack.c.bf16 %v305, %v305
        %v314 = vpack.c.bf16 %v306, %v306
        %v315 = vpack.c.bf16 %v307, %v307
        %v316 = vpack.c.bf16 %v308, %v308
        %v317 = vld [vmem:[#allocation5] sm:$0xff]
        %v318 = vld [vmem:[#allocation5 + $0x8] sm:$0xff]
        %v319 = vld [vmem:[#allocation5 + $0x10] sm:$0xff]
        %v320 = vld [vmem:[#allocation5 + $0x18] sm:$0xff]
        %v321 = vld [vmem:[#allocation5 + $0x20] sm:$0xff]
        %v322 = vld [vmem:[#allocation5 + $0x28] sm:$0xff]
        %v323 = vld [vmem:[#allocation5 + $0x30] sm:$0xff]
        %v324 = vld [vmem:[#allocation5 + $0x38] sm:$0xff]
        %v325 = vld [vmem:[#allocation5 + $0x40] sm:$0xff]
        %v326 = vld [vmem:[#allocation5 + $0x48] sm:$0xff]
        %v327 = vld [vmem:[#allocation5 + $0x50] sm:$0xff]
        %v328 = vld [vmem:[#allocation5 + $0x58] sm:$0xff]
        %v329 = vld [vmem:[#allocation5 + $0x60] sm:$0xff]
        %v330 = vld [vmem:[#allocation5 + $0x68] sm:$0xff]
        %v331 = vld [vmem:[#allocation5 + $0x70] sm:$0xff]
        %v332 = vld [vmem:[#allocation5 + $0x78] sm:$0xff]
        %v333 = vld [vmem:[#allocation5 + $0x80] sm:$0xff]
        %v334 = vld [vmem:[#allocation5 + $0x88] sm:$0xff]
        %v335 = vld [vmem:[#allocation5 + $0x90] sm:$0xff]
        %v336 = vld [vmem:[#allocation5 + $0x98] sm:$0xff]
        %v337 = vld [vmem:[#allocation5 + $0xa0] sm:$0xff]
        %v338 = vld [vmem:[#allocation5 + $0xa8] sm:$0xff]
        %v339 = vld [vmem:[#allocation5 + $0xb0] sm:$0xff]
        %v340 = vld [vmem:[#allocation5 + $0xb8] sm:$0xff]
        %v341 = vld [vmem:[#allocation5 + $0xc0] sm:$0xff]
        %v342 = vld [vmem:[#allocation5 + $0xc8] sm:$0xff]
        %v343 = vld [vmem:[#allocation5 + $0xd0] sm:$0xff]
        %v344 = vld [vmem:[#allocation5 + $0xd8] sm:$0xff]
        %v345 = vld [vmem:[#allocation5 + $0xe0] sm:$0xff]
        %v346 = vld [vmem:[#allocation5 + $0xe8] sm:$0xff]
        %v347 = vld [vmem:[#allocation5 + $0xf0] sm:$0xff]
        %v348 = vld [vmem:[#allocation5 + $0xf8] sm:$0xff]
        %v349 = vld [vmem:[#allocation5 + $0x100] sm:$0xff]
        %v350 = vld [vmem:[#allocation5 + $0x108] sm:$0xff]
        %v351 = vld [vmem:[#allocation5 + $0x110] sm:$0xff]
        %v352 = vld [vmem:[#allocation5 + $0x118] sm:$0xff]
        %v353 = vld [vmem:[#allocation5 + $0x120] sm:$0xff]
        %v354 = vld [vmem:[#allocation5 + $0x128] sm:$0xff]
        %v355 = vld [vmem:[#allocation5 + $0x130] sm:$0xff]
        %v356 = vld [vmem:[#allocation5 + $0x138] sm:$0xff]
        %v357 = vld [vmem:[#allocation5 + $0x140] sm:$0xff]
        %v358 = vld [vmem:[#allocation5 + $0x148] sm:$0xff]
        %v359 = vld [vmem:[#allocation5 + $0x150] sm:$0xff]
        %v360 = vld [vmem:[#allocation5 + $0x158] sm:$0xff]
        %v361 = vld [vmem:[#allocation5 + $0x160] sm:$0xff]
        %v362 = vld [vmem:[#allocation5 + $0x168] sm:$0xff]
        %v363 = vld [vmem:[#allocation5 + $0x170] sm:$0xff]
        %v364 = vld [vmem:[#allocation5 + $0x178] sm:$0xff]
        %v365 = vld [vmem:[#allocation5 + $0x180] sm:$0xff]
        %v366 = vld [vmem:[#allocation5 + $0x188] sm:$0xff]
        %v367 = vld [vmem:[#allocation5 + $0x190] sm:$0xff]
        %v368 = vld [vmem:[#allocation5 + $0x198] sm:$0xff]
        %v369 = vld [vmem:[#allocation5 + $0x1a0] sm:$0xff]
        %v370 = vld [vmem:[#allocation5 + $0x1a8] sm:$0xff]
        %v371 = vld [vmem:[#allocation5 + $0x1b0] sm:$0xff]
        %v372 = vld [vmem:[#allocation5 + $0x1b8] sm:$0xff]
        %v373 = vld [vmem:[#allocation5 + $0x1c0] sm:$0xff]
        %v374 = vld [vmem:[#allocation5 + $0x1c8] sm:$0xff]
        %v375 = vld [vmem:[#allocation5 + $0x1d0] sm:$0xff]
        %v376 = vld [vmem:[#allocation5 + $0x1d8] sm:$0xff]
        %v377 = vld [vmem:[#allocation5 + $0x1e0] sm:$0xff]
        %v378 = vld [vmem:[#allocation5 + $0x1e8] sm:$0xff]
        %v379 = vld [vmem:[#allocation5 + $0x1f0] sm:$0xff]
        %v380 = vld [vmem:[#allocation5 + $0x1f8] sm:$0xff]
        %v381 = vld [vmem:[#allocation5 + $0x200] sm:$0xff]
        %v382 = vld [vmem:[#allocation5 + $0x208] sm:$0xff]
        %v383 = vld [vmem:[#allocation5 + $0x210] sm:$0xff]
        %v384 = vld [vmem:[#allocation5 + $0x218] sm:$0xff]
        %v385 = vld [vmem:[#allocation5 + $0x220] sm:$0xff]
        %v386 = vld [vmem:[#allocation5 + $0x228] sm:$0xff]
        %v387 = vld [vmem:[#allocation5 + $0x230] sm:$0xff]
        %v388 = vld [vmem:[#allocation5 + $0x238] sm:$0xff]
        %v389 = vld [vmem:[#allocation5 + $0x240] sm:$0xff]
        %v390 = vld [vmem:[#allocation5 + $0x248] sm:$0xff]
        %v391 = vld [vmem:[#allocation5 + $0x250] sm:$0xff]
        %v392 = vld [vmem:[#allocation5 + $0x258] sm:$0xff]
        %v393 = vld [vmem:[#allocation5 + $0x260] sm:$0xff]
        %v394 = vld [vmem:[#allocation5 + $0x268] sm:$0xff]
        %v395 = vld [vmem:[#allocation5 + $0x270] sm:$0xff]
        %v396 = vld [vmem:[#allocation5 + $0x278] sm:$0xff]
        %v397 = vld [vmem:[#allocation5 + $0x280] sm:$0xff]
        %v398 = vld [vmem:[#allocation5 + $0x288] sm:$0xff]
        %v399 = vld [vmem:[#allocation5 + $0x290] sm:$0xff]
        %v400 = vld [vmem:[#allocation5 + $0x298] sm:$0xff]
        %v401 = vld [vmem:[#allocation5 + $0x2a0] sm:$0xff]
        %v402 = vld [vmem:[#allocation5 + $0x2a8] sm:$0xff]
        %v403 = vld [vmem:[#allocation5 + $0x2b0] sm:$0xff]
        %v404 = vld [vmem:[#allocation5 + $0x2b8] sm:$0xff]
        %v405 = vld [vmem:[#allocation5 + $0x2c0] sm:$0xff]
        %v406 = vld [vmem:[#allocation5 + $0x2c8] sm:$0xff]
        %v407 = vld [vmem:[#allocation5 + $0x2d0] sm:$0xff]
        %v408 = vld [vmem:[#allocation5 + $0x2d8] sm:$0xff]
        %v409 = vld [vmem:[#allocation5 + $0x2e0] sm:$0xff]
        %v410 = vld [vmem:[#allocation5 + $0x2e8] sm:$0xff]
        %v411 = vld [vmem:[#allocation5 + $0x2f0] sm:$0xff]
        %v412 = vld [vmem:[#allocation5 + $0x2f8] sm:$0xff]
        %v413 = vld [vmem:[#allocation5 + $0x300] sm:$0xff]
        %v414 = vld [vmem:[#allocation5 + $0x308] sm:$0xff]
        %v415 = vld [vmem:[#allocation5 + $0x310] sm:$0xff]
        %v416 = vld [vmem:[#allocation5 + $0x318] sm:$0xff]
        %v417 = vld [vmem:[#allocation5 + $0x320] sm:$0xff]
        %v418 = vld [vmem:[#allocation5 + $0x328] sm:$0xff]
        %v419 = vld [vmem:[#allocation5 + $0x330] sm:$0xff]
        %v420 = vld [vmem:[#allocation5 + $0x338] sm:$0xff]
        %v421 = vld [vmem:[#allocation5 + $0x340] sm:$0xff]
        %v422 = vld [vmem:[#allocation5 + $0x348] sm:$0xff]
        %v423 = vld [vmem:[#allocation5 + $0x350] sm:$0xff]
        %v424 = vld [vmem:[#allocation5 + $0x358] sm:$0xff]
        %v425 = vld [vmem:[#allocation5 + $0x360] sm:$0xff]
        %v426 = vld [vmem:[#allocation5 + $0x368] sm:$0xff]
        %v427 = vld [vmem:[#allocation5 + $0x370] sm:$0xff]
        %v428 = vld [vmem:[#allocation5 + $0x378] sm:$0xff]
        %v429 = vld [vmem:[#allocation5 + $0x380] sm:$0xff]
        %v430 = vld [vmem:[#allocation5 + $0x388] sm:$0xff]
        %v431 = vld [vmem:[#allocation5 + $0x390] sm:$0xff]
        %v432 = vld [vmem:[#allocation5 + $0x398] sm:$0xff]
        %v433 = vld [vmem:[#allocation5 + $0x3a0] sm:$0xff]
        %v434 = vld [vmem:[#allocation5 + $0x3a8] sm:$0xff]
        %v435 = vld [vmem:[#allocation5 + $0x3b0] sm:$0xff]
        %v436 = vld [vmem:[#allocation5 + $0x3b8] sm:$0xff]
        %v437 = vld [vmem:[#allocation5 + $0x3c0] sm:$0xff]
        %v438 = vld [vmem:[#allocation5 + $0x3c8] sm:$0xff]
        %v439 = vld [vmem:[#allocation5 + $0x3d0] sm:$0xff]
        %v440 = vld [vmem:[#allocation5 + $0x3d8] sm:$0xff]
        %v441 = vld [vmem:[#allocation5 + $0x3e0] sm:$0xff]
        %v442 = vld [vmem:[#allocation5 + $0x3e8] sm:$0xff]
        %v443 = vld [vmem:[#allocation5 + $0x3f0] sm:$0xff]
        %v444 = vld [vmem:[#allocation5 + $0x3f8] sm:$0xff]
        %v445 = vld [vmem:[#allocation5 + $0x400] sm:$0xff]
        %v446 = vld [vmem:[#allocation5 + $0x408] sm:$0xff]
        %v447 = vld [vmem:[#allocation5 + $0x410] sm:$0xff]
        %v448 = vld [vmem:[#allocation5 + $0x418] sm:$0xff]
        %v449 = vld [vmem:[#allocation5 + $0x420] sm:$0xff]
        %v450 = vld [vmem:[#allocation5 + $0x428] sm:$0xff]
        %v451 = vld [vmem:[#allocation5 + $0x430] sm:$0xff]
        %v452 = vld [vmem:[#allocation5 + $0x438] sm:$0xff]
        %v453 = vld [vmem:[#allocation5 + $0x440] sm:$0xff]
        %v454 = vld [vmem:[#allocation5 + $0x448] sm:$0xff]
        %v455 = vld [vmem:[#allocation5 + $0x450] sm:$0xff]
        %v456 = vld [vmem:[#allocation5 + $0x458] sm:$0xff]
        %v457 = vld [vmem:[#allocation5 + $0x460] sm:$0xff]
        %v458 = vld [vmem:[#allocation5 + $0x468] sm:$0xff]
        %v459 = vld [vmem:[#allocation5 + $0x470] sm:$0xff]
        %v460 = vld [vmem:[#allocation5 + $0x478] sm:$0xff]
        %v461 = vld [vmem:[#allocation5 + $0x480] sm:$0xff]
        %v462 = vld [vmem:[#allocation5 + $0x488] sm:$0xff]
        %v463 = vld [vmem:[#allocation5 + $0x490] sm:$0xff]
        %v464 = vld [vmem:[#allocation5 + $0x498] sm:$0xff]
        %v465 = vld [vmem:[#allocation5 + $0x4a0] sm:$0xff]
        %v466 = vld [vmem:[#allocation5 + $0x4a8] sm:$0xff]
        %v467 = vld [vmem:[#allocation5 + $0x4b0] sm:$0xff]
        %v468 = vld [vmem:[#allocation5 + $0x4b8] sm:$0xff]
        %v469 = vld [vmem:[#allocation5 + $0x4c0] sm:$0xff]
        %v470 = vld [vmem:[#allocation5 + $0x4c8] sm:$0xff]
        %v471 = vld [vmem:[#allocation5 + $0x4d0] sm:$0xff]
        %v472 = vld [vmem:[#allocation5 + $0x4d8] sm:$0xff]
        %v473 = vld [vmem:[#allocation5 + $0x4e0] sm:$0xff]
        %v474 = vld [vmem:[#allocation5 + $0x4e8] sm:$0xff]
        %v475 = vld [vmem:[#allocation5 + $0x4f0] sm:$0xff]
        %v476 = vld [vmem:[#allocation5 + $0x4f8] sm:$0xff]
        %v477 = vld [vmem:[#allocation5 + $0x500] sm:$0xff]
        %v478 = vld [vmem:[#allocation5 + $0x508] sm:$0xff]
        %v479 = vld [vmem:[#allocation5 + $0x510] sm:$0xff]
        %v480 = vld [vmem:[#allocation5 + $0x518] sm:$0xff]
        %v481 = vld [vmem:[#allocation5 + $0x520] sm:$0xff]
        %v482 = vld [vmem:[#allocation5 + $0x528] sm:$0xff]
        %v483 = vld [vmem:[#allocation5 + $0x530] sm:$0xff]
        %v484 = vld [vmem:[#allocation5 + $0x538] sm:$0xff]
        %v485 = vld [vmem:[#allocation5 + $0x540] sm:$0xff]
        %v486 = vld [vmem:[#allocation5 + $0x548] sm:$0xff]
        %v487 = vld [vmem:[#allocation5 + $0x550] sm:$0xff]
        %v488 = vld [vmem:[#allocation5 + $0x558] sm:$0xff]
        %v489 = vld [vmem:[#allocation5 + $0x560] sm:$0xff]
        %v490 = vld [vmem:[#allocation5 + $0x568] sm:$0xff]
        %v491 = vld [vmem:[#allocation5 + $0x570] sm:$0xff]
        %v492 = vld [vmem:[#allocation5 + $0x578] sm:$0xff]
        %v493 = vld [vmem:[#allocation5 + $0x580] sm:$0xff]
        %v494 = vld [vmem:[#allocation5 + $0x588] sm:$0xff]
        %v495 = vld [vmem:[#allocation5 + $0x590] sm:$0xff]
        %v496 = vld [vmem:[#allocation5 + $0x598] sm:$0xff]
        %v497 = vld [vmem:[#allocation5 + $0x5a0] sm:$0xff]
        %v498 = vld [vmem:[#allocation5 + $0x5a8] sm:$0xff]
        %v499 = vld [vmem:[#allocation5 + $0x5b0] sm:$0xff]
        %v500 = vld [vmem:[#allocation5 + $0x5b8] sm:$0xff]
        %v501 = vld [vmem:[#allocation5 + $0x5c0] sm:$0xff]
        %v502 = vld [vmem:[#allocation5 + $0x5c8] sm:$0xff]
        %v503 = vld [vmem:[#allocation5 + $0x5d0] sm:$0xff]
        %v504 = vld [vmem:[#allocation5 + $0x5d8] sm:$0xff]
        %v505 = vld [vmem:[#allocation5 + $0x5e0] sm:$0xff]
        %v506 = vld [vmem:[#allocation5 + $0x5e8] sm:$0xff]
        %v507 = vld [vmem:[#allocation5 + $0x5f0] sm:$0xff]
        %v508 = vld [vmem:[#allocation5 + $0x5f8] sm:$0xff]
        %v509 = vld [vmem:[#allocation5 + $0x600] sm:$0xff]
        %v510 = vld [vmem:[#allocation5 + $0x608] sm:$0xff]
        %v511 = vld [vmem:[#allocation5 + $0x610] sm:$0xff]
        %v512 = vld [vmem:[#allocation5 + $0x618] sm:$0xff]
        %v513 = vld [vmem:[#allocation5 + $0x620] sm:$0xff]
        %v514 = vld [vmem:[#allocation5 + $0x628] sm:$0xff]
        %v515 = vld [vmem:[#allocation5 + $0x630] sm:$0xff]
        %v516 = vld [vmem:[#allocation5 + $0x638] sm:$0xff]
        %v517 = vld [vmem:[#allocation5 + $0x640] sm:$0xff]
        %v518 = vld [vmem:[#allocation5 + $0x648] sm:$0xff]
        %v519 = vld [vmem:[#allocation5 + $0x650] sm:$0xff]
        %v520 = vld [vmem:[#allocation5 + $0x658] sm:$0xff]
        %v521 = vld [vmem:[#allocation5 + $0x660] sm:$0xff]
        %v522 = vld [vmem:[#allocation5 + $0x668] sm:$0xff]
        %v523 = vld [vmem:[#allocation5 + $0x670] sm:$0xff]
        %v524 = vld [vmem:[#allocation5 + $0x678] sm:$0xff]
        %v525 = vld [vmem:[#allocation5 + $0x680] sm:$0xff]
        %v526 = vld [vmem:[#allocation5 + $0x688] sm:$0xff]
        %v527 = vld [vmem:[#allocation5 + $0x690] sm:$0xff]
        %v528 = vld [vmem:[#allocation5 + $0x698] sm:$0xff]
        %v529 = vld [vmem:[#allocation5 + $0x6a0] sm:$0xff]
        %v530 = vld [vmem:[#allocation5 + $0x6a8] sm:$0xff]
        %v531 = vld [vmem:[#allocation5 + $0x6b0] sm:$0xff]
        %v532 = vld [vmem:[#allocation5 + $0x6b8] sm:$0xff]
        %v533 = vld [vmem:[#allocation5 + $0x6c0] sm:$0xff]
        %v534 = vld [vmem:[#allocation5 + $0x6c8] sm:$0xff]
        %v535 = vld [vmem:[#allocation5 + $0x6d0] sm:$0xff]
        %v536 = vld [vmem:[#allocation5 + $0x6d8] sm:$0xff]
        %v537 = vld [vmem:[#allocation5 + $0x6e0] sm:$0xff]
        %v538 = vld [vmem:[#allocation5 + $0x6e8] sm:$0xff]
        %v539 = vld [vmem:[#allocation5 + $0x6f0] sm:$0xff]
        %v540 = vld [vmem:[#allocation5 + $0x6f8] sm:$0xff]
        %v541 = vld [vmem:[#allocation5 + $0x700] sm:$0xff]
        %v542 = vld [vmem:[#allocation5 + $0x708] sm:$0xff]
        %v543 = vld [vmem:[#allocation5 + $0x710] sm:$0xff]
        %v544 = vld [vmem:[#allocation5 + $0x718] sm:$0xff]
        %v545 = vld [vmem:[#allocation5 + $0x720] sm:$0xff]
        %v546 = vld [vmem:[#allocation5 + $0x728] sm:$0xff]
        %v547 = vld [vmem:[#allocation5 + $0x730] sm:$0xff]
        %v548 = vld [vmem:[#allocation5 + $0x738] sm:$0xff]
        %v549 = vld [vmem:[#allocation5 + $0x740] sm:$0xff]
        %v550 = vld [vmem:[#allocation5 + $0x748] sm:$0xff]
        %v551 = vld [vmem:[#allocation5 + $0x750] sm:$0xff]
        %v552 = vld [vmem:[#allocation5 + $0x758] sm:$0xff]
        %v553 = vld [vmem:[#allocation5 + $0x760] sm:$0xff]
        %v554 = vld [vmem:[#allocation5 + $0x768] sm:$0xff]
        %v555 = vld [vmem:[#allocation5 + $0x770] sm:$0xff]
        %v556 = vld [vmem:[#allocation5 + $0x778] sm:$0xff]
        %v557 = vld [vmem:[#allocation5 + $0x780] sm:$0xff]
        %v558 = vld [vmem:[#allocation5 + $0x788] sm:$0xff]
        %v559 = vld [vmem:[#allocation5 + $0x790] sm:$0xff]
        %v560 = vld [vmem:[#allocation5 + $0x798] sm:$0xff]
        %v561 = vld [vmem:[#allocation5 + $0x7a0] sm:$0xff]
        %v562 = vld [vmem:[#allocation5 + $0x7a8] sm:$0xff]
        %v563 = vld [vmem:[#allocation5 + $0x7b0] sm:$0xff]
        %v564 = vld [vmem:[#allocation5 + $0x7b8] sm:$0xff]
        %v565 = vld [vmem:[#allocation5 + $0x7c0] sm:$0xff]
        %v566 = vld [vmem:[#allocation5 + $0x7c8] sm:$0xff]
        %v567 = vld [vmem:[#allocation5 + $0x7d0] sm:$0xff]
        %v568 = vld [vmem:[#allocation5 + $0x7d8] sm:$0xff]
        %v569 = vld [vmem:[#allocation5 + $0x7e0] sm:$0xff]
        %v570 = vld [vmem:[#allocation5 + $0x7e8] sm:$0xff]
        %v571 = vld [vmem:[#allocation5 + $0x7f0] sm:$0xff]
        %v572 = vld [vmem:[#allocation5 + $0x7f8] sm:$0xff]
        %v574 = vlaneseq
        %v575 = vshrl.u32 %v574, 7
        %v576 = vsub.s32 0, %v575
        %v577 = vrot.slane %v298, %v576
        %v578 = vlaneseq
        %v579 = vshrl.u32 %v578, 7
        %v580 = vsub.s32 1, %v579
        %v581 = vrot.slane %v298, %v580
        %v582 = vlaneseq
        %v583 = vshrl.u32 %v582, 7
        %v584 = vsub.s32 2, %v583
        %v585 = vrot.slane %v298, %v584
        %v586 = vlaneseq
        %v587 = vshrl.u32 %v586, 7
        %v588 = vsub.s32 3, %v587
        %v589 = vrot.slane %v298, %v588
        %v850 = vunpack.c.l.b16 %v317
        %v851 = vunpack.c.h.b16 %v317
        %v852 = vunpack.c.l.b16 %v318
        %v853 = vunpack.c.h.b16 %v318
        %v854 = vunpack.c.l.b16 %v319
        %v855 = vunpack.c.h.b16 %v319
        %v856 = vunpack.c.l.b16 %v320
        %v857 = vunpack.c.h.b16 %v320
        %v858 = vunpack.c.l.b16 %v321
        %v859 = vunpack.c.h.b16 %v321
        %v860 = vunpack.c.l.b16 %v322
        %v861 = vunpack.c.h.b16 %v322
        %v862 = vunpack.c.l.b16 %v323
        %v863 = vunpack.c.h.b16 %v323
        %v864 = vunpack.c.l.b16 %v324
        %v865 = vunpack.c.h.b16 %v324
        %v866 = vunpack.c.l.b16 %v325
        %v867 = vunpack.c.h.b16 %v325
        %v868 = vunpack.c.l.b16 %v326
        %v869 = vunpack.c.h.b16 %v326
        %v870 = vunpack.c.l.b16 %v327
        %v871 = vunpack.c.h.b16 %v327
        %v872 = vunpack.c.l.b16 %v328
        %v873 = vunpack.c.h.b16 %v328
        %v874 = vunpack.c.l.b16 %v329
        %v875 = vunpack.c.h.b16 %v329
        %v876 = vunpack.c.l.b16 %v330
        %v877 = vunpack.c.h.b16 %v330
        %v878 = vunpack.c.l.b16 %v331
        %v879 = vunpack.c.h.b16 %v331
        %v880 = vunpack.c.l.b16 %v332
        %v881 = vunpack.c.h.b16 %v332
        %v882 = vunpack.c.l.b16 %v333
        %v883 = vunpack.c.h.b16 %v333
        %v884 = vunpack.c.l.b16 %v334
        %v885 = vunpack.c.h.b16 %v334
        %v886 = vunpack.c.l.b16 %v335
        %v887 = vunpack.c.h.b16 %v335
        %v888 = vunpack.c.l.b16 %v336
        %v889 = vunpack.c.h.b16 %v336
        %v890 = vunpack.c.l.b16 %v337
        %v891 = vunpack.c.h.b16 %v337
        %v892 = vunpack.c.l.b16 %v338
        %v893 = vunpack.c.h.b16 %v338
        %v894 = vunpack.c.l.b16 %v339
        %v895 = vunpack.c.h.b16 %v339
        %v896 = vunpack.c.l.b16 %v340
        %v897 = vunpack.c.h.b16 %v340
        %v898 = vunpack.c.l.b16 %v341
        %v899 = vunpack.c.h.b16 %v341
        %v900 = vunpack.c.l.b16 %v342
        %v901 = vunpack.c.h.b16 %v342
        %v902 = vunpack.c.l.b16 %v343
        %v903 = vunpack.c.h.b16 %v343
        %v904 = vunpack.c.l.b16 %v344
        %v905 = vunpack.c.h.b16 %v344
        %v906 = vunpack.c.l.b16 %v345
        %v907 = vunpack.c.h.b16 %v345
        %v908 = vunpack.c.l.b16 %v346
        %v909 = vunpack.c.h.b16 %v346
        %v910 = vunpack.c.l.b16 %v347
        %v911 = vunpack.c.h.b16 %v347
        %v912 = vunpack.c.l.b16 %v348
        %v913 = vunpack.c.h.b16 %v348
        %v914 = vunpack.c.l.b16 %v349
        %v915 = vunpack.c.h.b16 %v349
        %v916 = vunpack.c.l.b16 %v350
        %v917 = vunpack.c.h.b16 %v350
        %v918 = vunpack.c.l.b16 %v351
        %v919 = vunpack.c.h.b16 %v351
        %v920 = vunpack.c.l.b16 %v352
        %v921 = vunpack.c.h.b16 %v352
        %v922 = vunpack.c.l.b16 %v353
        %v923 = vunpack.c.h.b16 %v353
        %v924 = vunpack.c.l.b16 %v354
        %v925 = vunpack.c.h.b16 %v354
        %v926 = vunpack.c.l.b16 %v355
        %v927 = vunpack.c.h.b16 %v355
        %v928 = vunpack.c.l.b16 %v356
        %v929 = vunpack.c.h.b16 %v356
        %v930 = vunpack.c.l.b16 %v357
        %v931 = vunpack.c.h.b16 %v357
        %v932 = vunpack.c.l.b16 %v358
        %v933 = vunpack.c.h.b16 %v358
        %v934 = vunpack.c.l.b16 %v359
        %v935 = vunpack.c.h.b16 %v359
        %v936 = vunpack.c.l.b16 %v360
        %v937 = vunpack.c.h.b16 %v360
        %v938 = vunpack.c.l.b16 %v361
        %v939 = vunpack.c.h.b16 %v361
        %v940 = vunpack.c.l.b16 %v362
        %v941 = vunpack.c.h.b16 %v362
        %v942 = vunpack.c.l.b16 %v363
        %v943 = vunpack.c.h.b16 %v363
        %v944 = vunpack.c.l.b16 %v364
        %v945 = vunpack.c.h.b16 %v364
        %v946 = vunpack.c.l.b16 %v365
        %v947 = vunpack.c.h.b16 %v365
        %v948 = vunpack.c.l.b16 %v366
        %v949 = vunpack.c.h.b16 %v366
        %v950 = vunpack.c.l.b16 %v367
        %v951 = vunpack.c.h.b16 %v367
        %v952 = vunpack.c.l.b16 %v368
        %v953 = vunpack.c.h.b16 %v368
        %v954 = vunpack.c.l.b16 %v369
        %v955 = vunpack.c.h.b16 %v369
        %v956 = vunpack.c.l.b16 %v370
        %v957 = vunpack.c.h.b16 %v370
        %v958 = vunpack.c.l.b16 %v371
        %v959 = vunpack.c.h.b16 %v371
        %v960 = vunpack.c.l.b16 %v372
        %v961 = vunpack.c.h.b16 %v372
        %v962 = vunpack.c.l.b16 %v373
        %v963 = vunpack.c.h.b16 %v373
        %v964 = vunpack.c.l.b16 %v374
        %v965 = vunpack.c.h.b16 %v374
        %v966 = vunpack.c.l.b16 %v375
        %v967 = vunpack.c.h.b16 %v375
        %v968 = vunpack.c.l.b16 %v376
        %v969 = vunpack.c.h.b16 %v376
        %v970 = vunpack.c.l.b16 %v377
        %v971 = vunpack.c.h.b16 %v377
        %v972 = vunpack.c.l.b16 %v378
        %v973 = vunpack.c.h.b16 %v378
        %v974 = vunpack.c.l.b16 %v379
        %v975 = vunpack.c.h.b16 %v379
        %v976 = vunpack.c.l.b16 %v380
        %v977 = vunpack.c.h.b16 %v380
        %v978 = vunpack.c.l.b16 %v381
        %v979 = vunpack.c.h.b16 %v381
        %v980 = vunpack.c.l.b16 %v382
        %v981 = vunpack.c.h.b16 %v382
        %v982 = vunpack.c.l.b16 %v383
        %v983 = vunpack.c.h.b16 %v383
        %v984 = vunpack.c.l.b16 %v384
        %v985 = vunpack.c.h.b16 %v384
        %v986 = vunpack.c.l.b16 %v385
        %v987 = vunpack.c.h.b16 %v385
        %v988 = vunpack.c.l.b16 %v386
        %v989 = vunpack.c.h.b16 %v386
        %v990 = vunpack.c.l.b16 %v387
        %v991 = vunpack.c.h.b16 %v387
        %v992 = vunpack.c.l.b16 %v388
        %v993 = vunpack.c.h.b16 %v388
        %v994 = vunpack.c.l.b16 %v389
        %v995 = vunpack.c.h.b16 %v389
        %v996 = vunpack.c.l.b16 %v390
        %v997 = vunpack.c.h.b16 %v390
        %v998 = vunpack.c.l.b16 %v391
        %v999 = vunpack.c.h.b16 %v391
        %v1000 = vunpack.c.l.b16 %v392
        %v1001 = vunpack.c.h.b16 %v392
        %v1002 = vunpack.c.l.b16 %v393
        %v1003 = vunpack.c.h.b16 %v393
        %v1004 = vunpack.c.l.b16 %v394
        %v1005 = vunpack.c.h.b16 %v394
        %v1006 = vunpack.c.l.b16 %v395
        %v1007 = vunpack.c.h.b16 %v395
        %v1008 = vunpack.c.l.b16 %v396
        %v1009 = vunpack.c.h.b16 %v396
        %v1010 = vunpack.c.l.b16 %v397
        %v1011 = vunpack.c.h.b16 %v397
        %v1012 = vunpack.c.l.b16 %v398
        %v1013 = vunpack.c.h.b16 %v398
        %v1014 = vunpack.c.l.b16 %v399
        %v1015 = vunpack.c.h.b16 %v399
        %v1016 = vunpack.c.l.b16 %v400
        %v1017 = vunpack.c.h.b16 %v400
        %v1018 = vunpack.c.l.b16 %v401
        %v1019 = vunpack.c.h.b16 %v401
        %v1020 = vunpack.c.l.b16 %v402
        %v1021 = vunpack.c.h.b16 %v402
        %v1022 = vunpack.c.l.b16 %v403
        %v1023 = vunpack.c.h.b16 %v403
        %v1024 = vunpack.c.l.b16 %v404
        %v1025 = vunpack.c.h.b16 %v404
        %v1026 = vunpack.c.l.b16 %v405
        %v1027 = vunpack.c.h.b16 %v405
        %v1028 = vunpack.c.l.b16 %v406
        %v1029 = vunpack.c.h.b16 %v406
        %v1030 = vunpack.c.l.b16 %v407
        %v1031 = vunpack.c.h.b16 %v407
        %v1032 = vunpack.c.l.b16 %v408
        %v1033 = vunpack.c.h.b16 %v408
        %v1034 = vunpack.c.l.b16 %v409
        %v1035 = vunpack.c.h.b16 %v409
        %v1036 = vunpack.c.l.b16 %v410
        %v1037 = vunpack.c.h.b16 %v410
        %v1038 = vunpack.c.l.b16 %v411
        %v1039 = vunpack.c.h.b16 %v411
        %v1040 = vunpack.c.l.b16 %v412
        %v1041 = vunpack.c.h.b16 %v412
        %v1042 = vunpack.c.l.b16 %v413
        %v1043 = vunpack.c.h.b16 %v413
        %v1044 = vunpack.c.l.b16 %v414
        %v1045 = vunpack.c.h.b16 %v414
        %v1046 = vunpack.c.l.b16 %v415
        %v1047 = vunpack.c.h.b16 %v415
        %v1048 = vunpack.c.l.b16 %v416
        %v1049 = vunpack.c.h.b16 %v416
        %v1050 = vunpack.c.l.b16 %v417
        %v1051 = vunpack.c.h.b16 %v417
        %v1052 = vunpack.c.l.b16 %v418
        %v1053 = vunpack.c.h.b16 %v418
        %v1054 = vunpack.c.l.b16 %v419
        %v1055 = vunpack.c.h.b16 %v419
        %v1056 = vunpack.c.l.b16 %v420
        %v1057 = vunpack.c.h.b16 %v420
        %v1058 = vunpack.c.l.b16 %v421
        %v1059 = vunpack.c.h.b16 %v421
        %v1060 = vunpack.c.l.b16 %v422
        %v1061 = vunpack.c.h.b16 %v422
        %v1062 = vunpack.c.l.b16 %v423
        %v1063 = vunpack.c.h.b16 %v423
        %v1064 = vunpack.c.l.b16 %v424
        %v1065 = vunpack.c.h.b16 %v424
        %v1066 = vunpack.c.l.b16 %v425
        %v1067 = vunpack.c.h.b16 %v425
        %v1068 = vunpack.c.l.b16 %v426
        %v1069 = vunpack.c.h.b16 %v426
        %v1070 = vunpack.c.l.b16 %v427
        %v1071 = vunpack.c.h.b16 %v427
        %v1072 = vunpack.c.l.b16 %v428
        %v1073 = vunpack.c.h.b16 %v428
        %v1074 = vunpack.c.l.b16 %v429
        %v1075 = vunpack.c.h.b16 %v429
        %v1076 = vunpack.c.l.b16 %v430
        %v1077 = vunpack.c.h.b16 %v430
        %v1078 = vunpack.c.l.b16 %v431
        %v1079 = vunpack.c.h.b16 %v431
        %v1080 = vunpack.c.l.b16 %v432
        %v1081 = vunpack.c.h.b16 %v432
        %v1082 = vunpack.c.l.b16 %v433
        %v1083 = vunpack.c.h.b16 %v433
        %v1084 = vunpack.c.l.b16 %v434
        %v1085 = vunpack.c.h.b16 %v434
        %v1086 = vunpack.c.l.b16 %v435
        %v1087 = vunpack.c.h.b16 %v435
        %v1088 = vunpack.c.l.b16 %v436
        %v1089 = vunpack.c.h.b16 %v436
        %v1090 = vunpack.c.l.b16 %v437
        %v1091 = vunpack.c.h.b16 %v437
        %v1092 = vunpack.c.l.b16 %v438
        %v1093 = vunpack.c.h.b16 %v438
        %v1094 = vunpack.c.l.b16 %v439
        %v1095 = vunpack.c.h.b16 %v439
        %v1096 = vunpack.c.l.b16 %v440
        %v1097 = vunpack.c.h.b16 %v440
        %v1098 = vunpack.c.l.b16 %v441
        %v1099 = vunpack.c.h.b16 %v441
        %v1100 = vunpack.c.l.b16 %v442
        %v1101 = vunpack.c.h.b16 %v442
        %v1102 = vunpack.c.l.b16 %v443
        %v1103 = vunpack.c.h.b16 %v443
        %v1104 = vunpack.c.l.b16 %v444
        %v1105 = vunpack.c.h.b16 %v444
        %v1106 = vunpack.c.l.b16 %v445
        %v1107 = vunpack.c.h.b16 %v445
        %v1108 = vunpack.c.l.b16 %v446
        %v1109 = vunpack.c.h.b16 %v446
        %v1110 = vunpack.c.l.b16 %v447
        %v1111 = vunpack.c.h.b16 %v447
        %v1112 = vunpack.c.l.b16 %v448
        %v1113 = vunpack.c.h.b16 %v448
        %v1114 = vunpack.c.l.b16 %v449
        %v1115 = vunpack.c.h.b16 %v449
        %v1116 = vunpack.c.l.b16 %v450
        %v1117 = vunpack.c.h.b16 %v450
        %v1118 = vunpack.c.l.b16 %v451
        %v1119 = vunpack.c.h.b16 %v451
        %v1120 = vunpack.c.l.b16 %v452
        %v1121 = vunpack.c.h.b16 %v452
        %v1122 = vunpack.c.l.b16 %v453
        %v1123 = vunpack.c.h.b16 %v453
        %v1124 = vunpack.c.l.b16 %v454
        %v1125 = vunpack.c.h.b16 %v454
        %v1126 = vunpack.c.l.b16 %v455
        %v1127 = vunpack.c.h.b16 %v455
        %v1128 = vunpack.c.l.b16 %v456
        %v1129 = vunpack.c.h.b16 %v456
        %v1130 = vunpack.c.l.b16 %v457
        %v1131 = vunpack.c.h.b16 %v457
        %v1132 = vunpack.c.l.b16 %v458
        %v1133 = vunpack.c.h.b16 %v458
        %v1134 = vunpack.c.l.b16 %v459
        %v1135 = vunpack.c.h.b16 %v459
        %v1136 = vunpack.c.l.b16 %v460
        %v1137 = vunpack.c.h.b16 %v460
        %v1138 = vunpack.c.l.b16 %v461
        %v1139 = vunpack.c.h.b16 %v461
        %v1140 = vunpack.c.l.b16 %v462
        %v1141 = vunpack.c.h.b16 %v462
        %v1142 = vunpack.c.l.b16 %v463
        %v1143 = vunpack.c.h.b16 %v463
        %v1144 = vunpack.c.l.b16 %v464
        %v1145 = vunpack.c.h.b16 %v464
        %v1146 = vunpack.c.l.b16 %v465
        %v1147 = vunpack.c.h.b16 %v465
        %v1148 = vunpack.c.l.b16 %v466
        %v1149 = vunpack.c.h.b16 %v466
        %v1150 = vunpack.c.l.b16 %v467
        %v1151 = vunpack.c.h.b16 %v467
        %v1152 = vunpack.c.l.b16 %v468
        %v1153 = vunpack.c.h.b16 %v468
        %v1154 = vunpack.c.l.b16 %v469
        %v1155 = vunpack.c.h.b16 %v469
        %v1156 = vunpack.c.l.b16 %v470
        %v1157 = vunpack.c.h.b16 %v470
        %v1158 = vunpack.c.l.b16 %v471
        %v1159 = vunpack.c.h.b16 %v471
        %v1160 = vunpack.c.l.b16 %v472
        %v1161 = vunpack.c.h.b16 %v472
        %v1162 = vunpack.c.l.b16 %v473
        %v1163 = vunpack.c.h.b16 %v473
        %v1164 = vunpack.c.l.b16 %v474
        %v1165 = vunpack.c.h.b16 %v474
        %v1166 = vunpack.c.l.b16 %v475
        %v1167 = vunpack.c.h.b16 %v475
        %v1168 = vunpack.c.l.b16 %v476
        %v1169 = vunpack.c.h.b16 %v476
        %v1170 = vunpack.c.l.b16 %v477
        %v1171 = vunpack.c.h.b16 %v477
        %v1172 = vunpack.c.l.b16 %v478
        %v1173 = vunpack.c.h.b16 %v478
        %v1174 = vunpack.c.l.b16 %v479
        %v1175 = vunpack.c.h.b16 %v479
        %v1176 = vunpack.c.l.b16 %v480
        %v1177 = vunpack.c.h.b16 %v480
        %v1178 = vunpack.c.l.b16 %v481
        %v1179 = vunpack.c.h.b16 %v481
        %v1180 = vunpack.c.l.b16 %v482
        %v1181 = vunpack.c.h.b16 %v482
        %v1182 = vunpack.c.l.b16 %v483
        %v1183 = vunpack.c.h.b16 %v483
        %v1184 = vunpack.c.l.b16 %v484
        %v1185 = vunpack.c.h.b16 %v484
        %v1186 = vunpack.c.l.b16 %v485
        %v1187 = vunpack.c.h.b16 %v485
        %v1188 = vunpack.c.l.b16 %v486
        %v1189 = vunpack.c.h.b16 %v486
        %v1190 = vunpack.c.l.b16 %v487
        %v1191 = vunpack.c.h.b16 %v487
        %v1192 = vunpack.c.l.b16 %v488
        %v1193 = vunpack.c.h.b16 %v488
        %v1194 = vunpack.c.l.b16 %v489
        %v1195 = vunpack.c.h.b16 %v489
        %v1196 = vunpack.c.l.b16 %v490
        %v1197 = vunpack.c.h.b16 %v490
        %v1198 = vunpack.c.l.b16 %v491
        %v1199 = vunpack.c.h.b16 %v491
        %v1200 = vunpack.c.l.b16 %v492
        %v1201 = vunpack.c.h.b16 %v492
        %v1202 = vunpack.c.l.b16 %v493
        %v1203 = vunpack.c.h.b16 %v493
        %v1204 = vunpack.c.l.b16 %v494
        %v1205 = vunpack.c.h.b16 %v494
        %v1206 = vunpack.c.l.b16 %v495
        %v1207 = vunpack.c.h.b16 %v495
        %v1208 = vunpack.c.l.b16 %v496
        %v1209 = vunpack.c.h.b16 %v496
        %v1210 = vunpack.c.l.b16 %v497
        %v1211 = vunpack.c.h.b16 %v497
        %v1212 = vunpack.c.l.b16 %v498
        %v1213 = vunpack.c.h.b16 %v498
        %v1214 = vunpack.c.l.b16 %v499
        %v1215 = vunpack.c.h.b16 %v499
        %v1216 = vunpack.c.l.b16 %v500
        %v1217 = vunpack.c.h.b16 %v500
        %v1218 = vunpack.c.l.b16 %v501
        %v1219 = vunpack.c.h.b16 %v501
        %v1220 = vunpack.c.l.b16 %v502
        %v1221 = vunpack.c.h.b16 %v502
        %v1222 = vunpack.c.l.b16 %v503
        %v1223 = vunpack.c.h.b16 %v503
        %v1224 = vunpack.c.l.b16 %v504
        %v1225 = vunpack.c.h.b16 %v504
        %v1226 = vunpack.c.l.b16 %v505
        %v1227 = vunpack.c.h.b16 %v505
        %v1228 = vunpack.c.l.b16 %v506
        %v1229 = vunpack.c.h.b16 %v506
        %v1230 = vunpack.c.l.b16 %v507
        %v1231 = vunpack.c.h.b16 %v507
        %v1232 = vunpack.c.l.b16 %v508
        %v1233 = vunpack.c.h.b16 %v508
        %v1234 = vunpack.c.l.b16 %v509
        %v1235 = vunpack.c.h.b16 %v509
        %v1236 = vunpack.c.l.b16 %v510
        %v1237 = vunpack.c.h.b16 %v510
        %v1238 = vunpack.c.l.b16 %v511
        %v1239 = vunpack.c.h.b16 %v511
        %v1240 = vunpack.c.l.b16 %v512
        %v1241 = vunpack.c.h.b16 %v512
        %v1242 = vunpack.c.l.b16 %v513
        %v1243 = vunpack.c.h.b16 %v513
        %v1244 = vunpack.c.l.b16 %v514
        %v1245 = vunpack.c.h.b16 %v514
        %v1246 = vunpack.c.l.b16 %v515
        %v1247 = vunpack.c.h.b16 %v515
        %v1248 = vunpack.c.l.b16 %v516
        %v1249 = vunpack.c.h.b16 %v516
        %v1250 = vunpack.c.l.b16 %v517
        %v1251 = vunpack.c.h.b16 %v517
        %v1252 = vunpack.c.l.b16 %v518
        %v1253 = vunpack.c.h.b16 %v518
        %v1254 = vunpack.c.l.b16 %v519
        %v1255 = vunpack.c.h.b16 %v519
        %v1256 = vunpack.c.l.b16 %v520
        %v1257 = vunpack.c.h.b16 %v520
        %v1258 = vunpack.c.l.b16 %v521
        %v1259 = vunpack.c.h.b16 %v521
        %v1260 = vunpack.c.l.b16 %v522
        %v1261 = vunpack.c.h.b16 %v522
        %v1262 = vunpack.c.l.b16 %v523
        %v1263 = vunpack.c.h.b16 %v523
        %v1264 = vunpack.c.l.b16 %v524
        %v1265 = vunpack.c.h.b16 %v524
        %v1266 = vunpack.c.l.b16 %v525
        %v1267 = vunpack.c.h.b16 %v525
        %v1268 = vunpack.c.l.b16 %v526
        %v1269 = vunpack.c.h.b16 %v526
        %v1270 = vunpack.c.l.b16 %v527
        %v1271 = vunpack.c.h.b16 %v527
        %v1272 = vunpack.c.l.b16 %v528
        %v1273 = vunpack.c.h.b16 %v528
        %v1274 = vunpack.c.l.b16 %v529
        %v1275 = vunpack.c.h.b16 %v529
        %v1276 = vunpack.c.l.b16 %v530
        %v1277 = vunpack.c.h.b16 %v530
        %v1278 = vunpack.c.l.b16 %v531
        %v1279 = vunpack.c.h.b16 %v531
        %v1280 = vunpack.c.l.b16 %v532
        %v1281 = vunpack.c.h.b16 %v532
        %v1282 = vunpack.c.l.b16 %v533
        %v1283 = vunpack.c.h.b16 %v533
        %v1284 = vunpack.c.l.b16 %v534
        %v1285 = vunpack.c.h.b16 %v534
        %v1286 = vunpack.c.l.b16 %v535
        %v1287 = vunpack.c.h.b16 %v535
        %v1288 = vunpack.c.l.b16 %v536
        %v1289 = vunpack.c.h.b16 %v536
        %v1290 = vunpack.c.l.b16 %v537
        %v1291 = vunpack.c.h.b16 %v537
        %v1292 = vunpack.c.l.b16 %v538
        %v1293 = vunpack.c.h.b16 %v538
        %v1294 = vunpack.c.l.b16 %v539
        %v1295 = vunpack.c.h.b16 %v539
        %v1296 = vunpack.c.l.b16 %v540
        %v1297 = vunpack.c.h.b16 %v540
        %v1298 = vunpack.c.l.b16 %v541
        %v1299 = vunpack.c.h.b16 %v541
        %v1300 = vunpack.c.l.b16 %v542
        %v1301 = vunpack.c.h.b16 %v542
        %v1302 = vunpack.c.l.b16 %v543
        %v1303 = vunpack.c.h.b16 %v543
        %v1304 = vunpack.c.l.b16 %v544
        %v1305 = vunpack.c.h.b16 %v544
        %v1306 = vunpack.c.l.b16 %v545
        %v1307 = vunpack.c.h.b16 %v545
        %v1308 = vunpack.c.l.b16 %v546
        %v1309 = vunpack.c.h.b16 %v546
        %v1310 = vunpack.c.l.b16 %v547
        %v1311 = vunpack.c.h.b16 %v547
        %v1312 = vunpack.c.l.b16 %v548
        %v1313 = vunpack.c.h.b16 %v548
        %v1314 = vunpack.c.l.b16 %v549
        %v1315 = vunpack.c.h.b16 %v549
        %v1316 = vunpack.c.l.b16 %v550
        %v1317 = vunpack.c.h.b16 %v550
        %v1318 = vunpack.c.l.b16 %v551
        %v1319 = vunpack.c.h.b16 %v551
        %v1320 = vunpack.c.l.b16 %v552
        %v1321 = vunpack.c.h.b16 %v552
        %v1322 = vunpack.c.l.b16 %v553
        %v1323 = vunpack.c.h.b16 %v553
        %v1324 = vunpack.c.l.b16 %v554
        %v1325 = vunpack.c.h.b16 %v554
        %v1326 = vunpack.c.l.b16 %v555
        %v1327 = vunpack.c.h.b16 %v555
        %v1328 = vunpack.c.l.b16 %v556
        %v1329 = vunpack.c.h.b16 %v556
        %v1330 = vunpack.c.l.b16 %v557
        %v1331 = vunpack.c.h.b16 %v557
        %v1332 = vunpack.c.l.b16 %v558
        %v1333 = vunpack.c.h.b16 %v558
        %v1334 = vunpack.c.l.b16 %v559
        %v1335 = vunpack.c.h.b16 %v559
        %v1336 = vunpack.c.l.b16 %v560
        %v1337 = vunpack.c.h.b16 %v560
        %v1338 = vunpack.c.l.b16 %v561
        %v1339 = vunpack.c.h.b16 %v561
        %v1340 = vunpack.c.l.b16 %v562
        %v1341 = vunpack.c.h.b16 %v562
        %v1342 = vunpack.c.l.b16 %v563
        %v1343 = vunpack.c.h.b16 %v563
        %v1344 = vunpack.c.l.b16 %v564
        %v1345 = vunpack.c.h.b16 %v564
        %v1346 = vunpack.c.l.b16 %v565
        %v1347 = vunpack.c.h.b16 %v565
        %v1348 = vunpack.c.l.b16 %v566
        %v1349 = vunpack.c.h.b16 %v566
        %v1350 = vunpack.c.l.b16 %v567
        %v1351 = vunpack.c.h.b16 %v567
        %v1352 = vunpack.c.l.b16 %v568
        %v1353 = vunpack.c.h.b16 %v568
        %v1354 = vunpack.c.l.b16 %v569
        %v1355 = vunpack.c.h.b16 %v569
        %v1356 = vunpack.c.l.b16 %v570
        %v1357 = vunpack.c.h.b16 %v570
        %v1358 = vunpack.c.l.b16 %v571
        %v1359 = vunpack.c.h.b16 %v571
        %v1360 = vunpack.c.l.b16 %v572
        %v1361 = vunpack.c.h.b16 %v572
        %v1362 = vpack.c.b16 %v854, %v850
        %v1363 = vpack.c.b16 %v855, %v851
        %v1364 = vpack.c.b16 %v856, %v852
        %v1365 = vpack.c.b16 %v857, %v853
        %v1366 = vpack.c.b16 %v862, %v858
        %v1367 = vpack.c.b16 %v863, %v859
        %v1368 = vpack.c.b16 %v864, %v860
        %v1369 = vpack.c.b16 %v865, %v861
        %v1370 = vpack.c.b16 %v870, %v866
        %v1371 = vpack.c.b16 %v871, %v867
        %v1372 = vpack.c.b16 %v872, %v868
        %v1373 = vpack.c.b16 %v873, %v869
        %v1374 = vpack.c.b16 %v878, %v874
        %v1375 = vpack.c.b16 %v879, %v875
        %v1376 = vpack.c.b16 %v880, %v876
        %v1377 = vpack.c.b16 %v881, %v877
        %v1378 = vpack.c.b16 %v886, %v882
        %v1379 = vpack.c.b16 %v887, %v883
        %v1380 = vpack.c.b16 %v888, %v884
        %v1381 = vpack.c.b16 %v889, %v885
        %v1382 = vpack.c.b16 %v894, %v890
        %v1383 = vpack.c.b16 %v895, %v891
        %v1384 = vpack.c.b16 %v896, %v892
        %v1385 = vpack.c.b16 %v897, %v893
        %v1386 = vpack.c.b16 %v902, %v898
        %v1387 = vpack.c.b16 %v903, %v899
        %v1388 = vpack.c.b16 %v904, %v900
        %v1389 = vpack.c.b16 %v905, %v901
        %v1390 = vpack.c.b16 %v910, %v906
        %v1391 = vpack.c.b16 %v911, %v907
        %v1392 = vpack.c.b16 %v912, %v908
        %v1393 = vpack.c.b16 %v913, %v909
        %v1394 = vpack.c.b16 %v918, %v914
        %v1395 = vpack.c.b16 %v919, %v915
        %v1396 = vpack.c.b16 %v920, %v916
        %v1397 = vpack.c.b16 %v921, %v917
        %v1398 = vpack.c.b16 %v926, %v922
        %v1399 = vpack.c.b16 %v927, %v923
        %v1400 = vpack.c.b16 %v928, %v924
        %v1401 = vpack.c.b16 %v929, %v925
        %v1402 = vpack.c.b16 %v934, %v930
        %v1403 = vpack.c.b16 %v935, %v931
        %v1404 = vpack.c.b16 %v936, %v932
        %v1405 = vpack.c.b16 %v937, %v933
        %v1406 = vpack.c.b16 %v942, %v938
        %v1407 = vpack.c.b16 %v943, %v939
        %v1408 = vpack.c.b16 %v944, %v940
        %v1409 = vpack.c.b16 %v945, %v941
        %v1410 = vpack.c.b16 %v950, %v946
        %v1411 = vpack.c.b16 %v951, %v947
        %v1412 = vpack.c.b16 %v952, %v948
        %v1413 = vpack.c.b16 %v953, %v949
        %v1414 = vpack.c.b16 %v958, %v954
        %v1415 = vpack.c.b16 %v959, %v955
        %v1416 = vpack.c.b16 %v960, %v956
        %v1417 = vpack.c.b16 %v961, %v957
        %v1418 = vpack.c.b16 %v966, %v962
        %v1419 = vpack.c.b16 %v967, %v963
        %v1420 = vpack.c.b16 %v968, %v964
        %v1421 = vpack.c.b16 %v969, %v965
        %v1422 = vpack.c.b16 %v974, %v970
        %v1423 = vpack.c.b16 %v975, %v971
        %v1424 = vpack.c.b16 %v976, %v972
        %v1425 = vpack.c.b16 %v977, %v973
        %v1426 = vpack.c.b16 %v982, %v978
        %v1427 = vpack.c.b16 %v983, %v979
        %v1428 = vpack.c.b16 %v984, %v980
        %v1429 = vpack.c.b16 %v985, %v981
        %v1430 = vpack.c.b16 %v990, %v986
        %v1431 = vpack.c.b16 %v991, %v987
        %v1432 = vpack.c.b16 %v992, %v988
        %v1433 = vpack.c.b16 %v993, %v989
        %v1434 = vpack.c.b16 %v998, %v994
        %v1435 = vpack.c.b16 %v999, %v995
        %v1436 = vpack.c.b16 %v1000, %v996
        %v1437 = vpack.c.b16 %v1001, %v997
        %v1438 = vpack.c.b16 %v1006, %v1002
        %v1439 = vpack.c.b16 %v1007, %v1003
        %v1440 = vpack.c.b16 %v1008, %v1004
        %v1441 = vpack.c.b16 %v1009, %v1005
        %v1442 = vpack.c.b16 %v1014, %v1010
        %v1443 = vpack.c.b16 %v1015, %v1011
        %v1444 = vpack.c.b16 %v1016, %v1012
        %v1445 = vpack.c.b16 %v1017, %v1013
        %v1446 = vpack.c.b16 %v1022, %v1018
        %v1447 = vpack.c.b16 %v1023, %v1019
        %v1448 = vpack.c.b16 %v1024, %v1020
        %v1449 = vpack.c.b16 %v1025, %v1021
        %v1450 = vpack.c.b16 %v1030, %v1026
        %v1451 = vpack.c.b16 %v1031, %v1027
        %v1452 = vpack.c.b16 %v1032, %v1028
        %v1453 = vpack.c.b16 %v1033, %v1029
        %v1454 = vpack.c.b16 %v1038, %v1034
        %v1455 = vpack.c.b16 %v1039, %v1035
        %v1456 = vpack.c.b16 %v1040, %v1036
        %v1457 = vpack.c.b16 %v1041, %v1037
        %v1458 = vpack.c.b16 %v1046, %v1042
        %v1459 = vpack.c.b16 %v1047, %v1043
        %v1460 = vpack.c.b16 %v1048, %v1044
        %v1461 = vpack.c.b16 %v1049, %v1045
        %v1462 = vpack.c.b16 %v1054, %v1050
        %v1463 = vpack.c.b16 %v1055, %v1051
        %v1464 = vpack.c.b16 %v1056, %v1052
        %v1465 = vpack.c.b16 %v1057, %v1053
        %v1466 = vpack.c.b16 %v1062, %v1058
        %v1467 = vpack.c.b16 %v1063, %v1059
        %v1468 = vpack.c.b16 %v1064, %v1060
        %v1469 = vpack.c.b16 %v1065, %v1061
        %v1470 = vpack.c.b16 %v1070, %v1066
        %v1471 = vpack.c.b16 %v1071, %v1067
        %v1472 = vpack.c.b16 %v1072, %v1068
        %v1473 = vpack.c.b16 %v1073, %v1069
        %v1474 = vpack.c.b16 %v1078, %v1074
        %v1475 = vpack.c.b16 %v1079, %v1075
        %v1476 = vpack.c.b16 %v1080, %v1076
        %v1477 = vpack.c.b16 %v1081, %v1077
        %v1478 = vpack.c.b16 %v1086, %v1082
        %v1479 = vpack.c.b16 %v1087, %v1083
        %v1480 = vpack.c.b16 %v1088, %v1084
        %v1481 = vpack.c.b16 %v1089, %v1085
        %v1482 = vpack.c.b16 %v1094, %v1090
        %v1483 = vpack.c.b16 %v1095, %v1091
        %v1484 = vpack.c.b16 %v1096, %v1092
        %v1485 = vpack.c.b16 %v1097, %v1093
        %v1486 = vpack.c.b16 %v1102, %v1098
        %v1487 = vpack.c.b16 %v1103, %v1099
        %v1488 = vpack.c.b16 %v1104, %v1100
        %v1489 = vpack.c.b16 %v1105, %v1101
        %v1490 = vpack.c.b16 %v1110, %v1106
        %v1491 = vpack.c.b16 %v1111, %v1107
        %v1492 = vpack.c.b16 %v1112, %v1108
        %v1493 = vpack.c.b16 %v1113, %v1109
        %v1494 = vpack.c.b16 %v1118, %v1114
        %v1495 = vpack.c.b16 %v1119, %v1115
        %v1496 = vpack.c.b16 %v1120, %v1116
        %v1497 = vpack.c.b16 %v1121, %v1117
        %v1498 = vpack.c.b16 %v1126, %v1122
        %v1499 = vpack.c.b16 %v1127, %v1123
        %v1500 = vpack.c.b16 %v1128, %v1124
        %v1501 = vpack.c.b16 %v1129, %v1125
        %v1502 = vpack.c.b16 %v1134, %v1130
        %v1503 = vpack.c.b16 %v1135, %v1131
        %v1504 = vpack.c.b16 %v1136, %v1132
        %v1505 = vpack.c.b16 %v1137, %v1133
        %v1506 = vpack.c.b16 %v1142, %v1138
        %v1507 = vpack.c.b16 %v1143, %v1139
        %v1508 = vpack.c.b16 %v1144, %v1140
        %v1509 = vpack.c.b16 %v1145, %v1141
        %v1510 = vpack.c.b16 %v1150, %v1146
        %v1511 = vpack.c.b16 %v1151, %v1147
        %v1512 = vpack.c.b16 %v1152, %v1148
        %v1513 = vpack.c.b16 %v1153, %v1149
        %v1514 = vpack.c.b16 %v1158, %v1154
        %v1515 = vpack.c.b16 %v1159, %v1155
        %v1516 = vpack.c.b16 %v1160, %v1156
        %v1517 = vpack.c.b16 %v1161, %v1157
        %v1518 = vpack.c.b16 %v1166, %v1162
        %v1519 = vpack.c.b16 %v1167, %v1163
        %v1520 = vpack.c.b16 %v1168, %v1164
        %v1521 = vpack.c.b16 %v1169, %v1165
        %v1522 = vpack.c.b16 %v1174, %v1170
        %v1523 = vpack.c.b16 %v1175, %v1171
        %v1524 = vpack.c.b16 %v1176, %v1172
        %v1525 = vpack.c.b16 %v1177, %v1173
        %v1526 = vpack.c.b16 %v1182, %v1178
        %v1527 = vpack.c.b16 %v1183, %v1179
        %v1528 = vpack.c.b16 %v1184, %v1180
        %v1529 = vpack.c.b16 %v1185, %v1181
        %v1530 = vpack.c.b16 %v1190, %v1186
        %v1531 = vpack.c.b16 %v1191, %v1187
        %v1532 = vpack.c.b16 %v1192, %v1188
        %v1533 = vpack.c.b16 %v1193, %v1189
        %v1534 = vpack.c.b16 %v1198, %v1194
        %v1535 = vpack.c.b16 %v1199, %v1195
        %v1536 = vpack.c.b16 %v1200, %v1196
        %v1537 = vpack.c.b16 %v1201, %v1197
        %v1538 = vpack.c.b16 %v1206, %v1202
        %v1539 = vpack.c.b16 %v1207, %v1203
        %v1540 = vpack.c.b16 %v1208, %v1204
        %v1541 = vpack.c.b16 %v1209, %v1205
        %v1542 = vpack.c.b16 %v1214, %v1210
        %v1543 = vpack.c.b16 %v1215, %v1211
        %v1544 = vpack.c.b16 %v1216, %v1212
        %v1545 = vpack.c.b16 %v1217, %v1213
        %v1546 = vpack.c.b16 %v1222, %v1218
        %v1547 = vpack.c.b16 %v1223, %v1219
        %v1548 = vpack.c.b16 %v1224, %v1220
        %v1549 = vpack.c.b16 %v1225, %v1221
        %v1550 = vpack.c.b16 %v1230, %v1226
        %v1551 = vpack.c.b16 %v1231, %v1227
        %v1552 = vpack.c.b16 %v1232, %v1228
        %v1553 = vpack.c.b16 %v1233, %v1229
        %v1554 = vpack.c.b16 %v1238, %v1234
        %v1555 = vpack.c.b16 %v1239, %v1235
        %v1556 = vpack.c.b16 %v1240, %v1236
        %v1557 = vpack.c.b16 %v1241, %v1237
        %v1558 = vpack.c.b16 %v1246, %v1242
        %v1559 = vpack.c.b16 %v1247, %v1243
        %v1560 = vpack.c.b16 %v1248, %v1244
        %v1561 = vpack.c.b16 %v1249, %v1245
        %v1562 = vpack.c.b16 %v1254, %v1250
        %v1563 = vpack.c.b16 %v1255, %v1251
        %v1564 = vpack.c.b16 %v1256, %v1252
        %v1565 = vpack.c.b16 %v1257, %v1253
        %v1566 = vpack.c.b16 %v1262, %v1258
        %v1567 = vpack.c.b16 %v1263, %v1259
        %v1568 = vpack.c.b16 %v1264, %v1260
        %v1569 = vpack.c.b16 %v1265, %v1261
        %v1570 = vpack.c.b16 %v1270, %v1266
        %v1571 = vpack.c.b16 %v1271, %v1267
        %v1572 = vpack.c.b16 %v1272, %v1268
        %v1573 = vpack.c.b16 %v1273, %v1269
        %v1574 = vpack.c.b16 %v1278, %v1274
        %v1575 = vpack.c.b16 %v1279, %v1275
        %v1576 = vpack.c.b16 %v1280, %v1276
        %v1577 = vpack.c.b16 %v1281, %v1277
        %v1578 = vpack.c.b16 %v1286, %v1282
        %v1579 = vpack.c.b16 %v1287, %v1283
        %v1580 = vpack.c.b16 %v1288, %v1284
        %v1581 = vpack.c.b16 %v1289, %v1285
        %v1582 = vpack.c.b16 %v1294, %v1290
        %v1583 = vpack.c.b16 %v1295, %v1291
        %v1584 = vpack.c.b16 %v1296, %v1292
        %v1585 = vpack.c.b16 %v1297, %v1293
        %v1586 = vpack.c.b16 %v1302, %v1298
        %v1587 = vpack.c.b16 %v1303, %v1299
        %v1588 = vpack.c.b16 %v1304, %v1300
        %v1589 = vpack.c.b16 %v1305, %v1301
        %v1590 = vpack.c.b16 %v1310, %v1306
        %v1591 = vpack.c.b16 %v1311, %v1307
        %v1592 = vpack.c.b16 %v1312, %v1308
        %v1593 = vpack.c.b16 %v1313, %v1309
        %v1594 = vpack.c.b16 %v1318, %v1314
        %v1595 = vpack.c.b16 %v1319, %v1315
        %v1596 = vpack.c.b16 %v1320, %v1316
        %v1597 = vpack.c.b16 %v1321, %v1317
        %v1598 = vpack.c.b16 %v1326, %v1322
        %v1599 = vpack.c.b16 %v1327, %v1323
        %v1600 = vpack.c.b16 %v1328, %v1324
        %v1601 = vpack.c.b16 %v1329, %v1325
        %v1602 = vpack.c.b16 %v1334, %v1330
        %v1603 = vpack.c.b16 %v1335, %v1331
        %v1604 = vpack.c.b16 %v1336, %v1332
        %v1605 = vpack.c.b16 %v1337, %v1333
        %v1606 = vpack.c.b16 %v1342, %v1338
        %v1607 = vpack.c.b16 %v1343, %v1339
        %v1608 = vpack.c.b16 %v1344, %v1340
        %v1609 = vpack.c.b16 %v1345, %v1341
        %v1610 = vpack.c.b16 %v1350, %v1346
        %v1611 = vpack.c.b16 %v1351, %v1347
        %v1612 = vpack.c.b16 %v1352, %v1348
        %v1613 = vpack.c.b16 %v1353, %v1349
        %v1614 = vpack.c.b16 %v1358, %v1354
        %v1615 = vpack.c.b16 %v1359, %v1355
        %v1616 = vpack.c.b16 %v1360, %v1356
        %v1617 = vpack.c.b16 %v1361, %v1357
        %1874 = vmatprep.subr.bf16.mxu0 %v1363
        %1875 = vmatpush1.bf16.msra.mxu0 %v1362
        %1876 = vmatprep.subr.bf16.mxu0 %v1367
        %1877 = vmatpush1.bf16.msra.mxu0 %v1366
        %1878 = vmatprep.subr.bf16.mxu0 %v1371
        %1879 = vmatpush1.bf16.msra.mxu0 %v1370
        %1880 = vmatprep.subr.bf16.mxu0 %v1375
        %1881 = vmatpush1.bf16.msra.mxu0 %v1374
        %1882 = vmatprep.subr.bf16.mxu0 %v1379
        %1883 = vmatpush1.bf16.msra.mxu0 %v1378
        %1884 = vmatprep.subr.bf16.mxu0 %v1383
        %1885 = vmatpush1.bf16.msra.mxu0 %v1382
        %1886 = vmatprep.subr.bf16.mxu0 %v1387
        %1887 = vmatpush1.bf16.msra.mxu0 %v1386
        %1888 = vmatprep.subr.bf16.mxu0 %v1391
        %1889 = vmatpush1.bf16.msra.mxu0 %v1390
        %1890 = vmatprep.subr.bf16.mxu0 %v1395
        %1891 = vmatpush1.bf16.msra.mxu0 %v1394
        %1892 = vmatprep.subr.bf16.mxu0 %v1399
        %1893 = vmatpush1.bf16.msra.mxu0 %v1398
        %1894 = vmatprep.subr.bf16.mxu0 %v1403
        %1895 = vmatpush1.bf16.msra.mxu0 %v1402
        %1896 = vmatprep.subr.bf16.mxu0 %v1407
        %1897 = vmatpush1.bf16.msra.mxu0 %v1406
        %1898 = vmatprep.subr.bf16.mxu0 %v1411
        %1899 = vmatpush1.bf16.msra.mxu0 %v1410
        %1900 = vmatprep.subr.bf16.mxu0 %v1415
        %1901 = vmatpush1.bf16.msra.mxu0 %v1414
        %1902 = vmatprep.subr.bf16.mxu0 %v1419
        %1903 = vmatpush1.bf16.msra.mxu0 %v1418
        %1904 = vmatprep.subr.bf16.mxu0 %v1423
        %1905 = vmatpush1.bf16.msra.mxu0 %v1422
        %1906 = vmatprep.mubr.bf16.mxu0 %v310
        %1907 = vmatmul.mubr.bf16.gmra.mrb[0].mxu0 %v309
        %v1908 = vpop.f32.mrb[0].mxu0
        %v1909 = vadd.f32 %v577, %v1908
        %v1910 = vpop.f32.mrb[0].mxu0
        %v1911 = vadd.f32 %v581, %v1910
        %v1912 = vpop.f32.mrb[0].mxu0
        %v1913 = vpop.f32.mrb[0].mxu0
        %1914 = vdwg.mxu0
        %1915 = vmatprep.subr.bf16.mxu0 %v1427
        %1916 = vmatpush1.bf16.msra.mxu0 %v1426
        %1917 = vmatprep.subr.bf16.mxu0 %v1431
        %1918 = vmatpush1.bf16.msra.mxu0 %v1430
        %1919 = vmatprep.subr.bf16.mxu0 %v1435
        %1920 = vmatpush1.bf16.msra.mxu0 %v1434
        %1921 = vmatprep.subr.bf16.mxu0 %v1439
        %1922 = vmatpush1.bf16.msra.mxu0 %v1438
        %1923 = vmatprep.subr.bf16.mxu0 %v1443
        %1924 = vmatpush1.bf16.msra.mxu0 %v1442
        %1925 = vmatprep.subr.bf16.mxu0 %v1447
        %1926 = vmatpush1.bf16.msra.mxu0 %v1446
        %1927 = vmatprep.subr.bf16.mxu0 %v1451
        %1928 = vmatpush1.bf16.msra.mxu0 %v1450
        %1929 = vmatprep.subr.bf16.mxu0 %v1455
        %1930 = vmatpush1.bf16.msra.mxu0 %v1454
        %1931 = vmatprep.subr.bf16.mxu0 %v1459
        %1932 = vmatpush1.bf16.msra.mxu0 %v1458
        %1933 = vmatprep.subr.bf16.mxu0 %v1463
        %1934 = vmatpush1.bf16.msra.mxu0 %v1462
        %1935 = vmatprep.subr.bf16.mxu0 %v1467
        %1936 = vmatpush1.bf16.msra.mxu0 %v1466
        %1937 = vmatprep.subr.bf16.mxu0 %v1471
        %1938 = vmatpush1.bf16.msra.mxu0 %v1470
        %1939 = vmatprep.subr.bf16.mxu0 %v1475
        %1940 = vmatpush1.bf16.msra.mxu0 %v1474
        %1941 = vmatprep.subr.bf16.mxu0 %v1479
        %1942 = vmatpush1.bf16.msra.mxu0 %v1478
        %1943 = vmatprep.subr.bf16.mxu0 %v1483
        %1944 = vmatpush1.bf16.msra.mxu0 %v1482
        %1945 = vmatprep.subr.bf16.mxu0 %v1487
        %1946 = vmatpush1.bf16.msra.mxu0 %v1486
        %1947 = vmatprep.mubr.bf16.mxu0 %v312
        %1948 = vmatmul.mubr.bf16.gmra.mrb[0].mxu0 %v311
        %v1949 = vpop.f32.mrb[0].mxu0
        %v1950 = vadd.f32 %v1909, %v1949
        %v1951 = vpop.f32.mrb[0].mxu0
        %v1952 = vadd.f32 %v1911, %v1951
        %v1953 = vpop.f32.mrb[0].mxu0
        %v1954 = vpop.f32.mrb[0].mxu0
        %1955 = vdwg.mxu0
        %1956 = vmatprep.subr.bf16.mxu0 %v1491
        %1957 = vmatpush1.bf16.msra.mxu0 %v1490
        %1958 = vmatprep.subr.bf16.mxu0 %v1495
        %1959 = vmatpush1.bf16.msra.mxu0 %v1494
        %1960 = vmatprep.subr.bf16.mxu0 %v1499
        %1961 = vmatpush1.bf16.msra.mxu0 %v1498
        %1962 = vmatprep.subr.bf16.mxu0 %v1503
        %1963 = vmatpush1.bf16.msra.mxu0 %v1502
        %1964 = vmatprep.subr.bf16.mxu0 %v1507
        %1965 = vmatpush1.bf16.msra.mxu0 %v1506
        %1966 = vmatprep.subr.bf16.mxu0 %v1511
        %1967 = vmatpush1.bf16.msra.mxu0 %v1510
        %1968 = vmatprep.subr.bf16.mxu0 %v1515
        %1969 = vmatpush1.bf16.msra.mxu0 %v1514
        %1970 = vmatprep.subr.bf16.mxu0 %v1519
        %1971 = vmatpush1.bf16.msra.mxu0 %v1518
        %1972 = vmatprep.subr.bf16.mxu0 %v1523
        %1973 = vmatpush1.bf16.msra.mxu0 %v1522
        %1974 = vmatprep.subr.bf16.mxu0 %v1527
        %1975 = vmatpush1.bf16.msra.mxu0 %v1526
        %1976 = vmatprep.subr.bf16.mxu0 %v1531
        %1977 = vmatpush1.bf16.msra.mxu0 %v1530
        %1978 = vmatprep.subr.bf16.mxu0 %v1535
        %1979 = vmatpush1.bf16.msra.mxu0 %v1534
        %1980 = vmatprep.subr.bf16.mxu0 %v1539
        %1981 = vmatpush1.bf16.msra.mxu0 %v1538
        %1982 = vmatprep.subr.bf16.mxu0 %v1543
        %1983 = vmatpush1.bf16.msra.mxu0 %v1542
        %1984 = vmatprep.subr.bf16.mxu0 %v1547
        %1985 = vmatpush1.bf16.msra.mxu0 %v1546
        %1986 = vmatprep.subr.bf16.mxu0 %v1551
        %1987 = vmatpush1.bf16.msra.mxu0 %v1550
        %1988 = vmatprep.mubr.bf16.mxu0 %v314
        %1989 = vmatmul.mubr.bf16.gmra.mrb[0].mxu0 %v313
        %v1990 = vpop.f32.mrb[0].mxu0
        %v1991 = vadd.f32 %v1950, %v1990
        %v1992 = vpop.f32.mrb[0].mxu0
        %v1993 = vadd.f32 %v1952, %v1992
        %v1994 = vpop.f32.mrb[0].mxu0
        %v1995 = vpop.f32.mrb[0].mxu0
        %1996 = vdwg.mxu0
        %1997 = vmatprep.subr.bf16.mxu0 %v1555
        %1998 = vmatpush1.bf16.msra.mxu0 %v1554
        %1999 = vmatprep.subr.bf16.mxu0 %v1559
        %2000 = vmatpush1.bf16.msra.mxu0 %v1558
        %2001 = vmatprep.subr.bf16.mxu0 %v1563
        %2002 = vmatpush1.bf16.msra.mxu0 %v1562
        %2003 = vmatprep.subr.bf16.mxu0 %v1567
        %2004 = vmatpush1.bf16.msra.mxu0 %v1566
        %2005 = vmatprep.subr.bf16.mxu0 %v1571
        %2006 = vmatpush1.bf16.msra.mxu0 %v1570
        %2007 = vmatprep.subr.bf16.mxu0 %v1575
        %2008 = vmatpush1.bf16.msra.mxu0 %v1574
        %2009 = vmatprep.subr.bf16.mxu0 %v1579
        %2010 = vmatpush1.bf16.msra.mxu0 %v1578
        %2011 = vmatprep.subr.bf16.mxu0 %v1583
        %2012 = vmatpush1.bf16.msra.mxu0 %v1582
        %2013 = vmatprep.subr.bf16.mxu0 %v1587
        %2014 = vmatpush1.bf16.msra.mxu0 %v1586
        %2015 = vmatprep.subr.bf16.mxu0 %v1591
        %2016 = vmatpush1.bf16.msra.mxu0 %v1590
        %2017 = vmatprep.subr.bf16.mxu0 %v1595
        %2018 = vmatpush1.bf16.msra.mxu0 %v1594
        %2019 = vmatprep.subr.bf16.mxu0 %v1599
        %2020 = vmatpush1.bf16.msra.mxu0 %v1598
        %2021 = vmatprep.subr.bf16.mxu0 %v1603
        %2022 = vmatpush1.bf16.msra.mxu0 %v1602
        %2023 = vmatprep.subr.bf16.mxu0 %v1607
        %2024 = vmatpush1.bf16.msra.mxu0 %v1606
        %2025 = vmatprep.subr.bf16.mxu0 %v1611
        %2026 = vmatpush1.bf16.msra.mxu0 %v1610
        %2027 = vmatprep.subr.bf16.mxu0 %v1615
        %2028 = vmatpush1.bf16.msra.mxu0 %v1614
        %2029 = vmatprep.mubr.bf16.mxu0 %v316
        %2030 = vmatmul.mubr.bf16.gmra.mrb[0].mxu0 %v315
        %v2031 = vpop.f32.mrb[0].mxu0
        %v2032 = vadd.f32 %v1991, %v2031
        %v2033 = vpop.f32.mrb[0].mxu0
        %v2034 = vadd.f32 %v1993, %v2033
        %v2035 = vpop.f32.mrb[0].mxu0
        %v2036 = vpop.f32.mrb[0].mxu0
        %2037 = vdwg.mxu0
        %2038 = vmatprep.subr.bf16.mxu0 %v1365
        %2039 = vmatpush1.bf16.msra.mxu0 %v1364
        %2040 = vmatprep.subr.bf16.mxu0 %v1369
        %2041 = vmatpush1.bf16.msra.mxu0 %v1368
        %2042 = vmatprep.subr.bf16.mxu0 %v1373
        %2043 = vmatpush1.bf16.msra.mxu0 %v1372
        %2044 = vmatprep.subr.bf16.mxu0 %v1377
        %2045 = vmatpush1.bf16.msra.mxu0 %v1376
        %2046 = vmatprep.subr.bf16.mxu0 %v1381
        %2047 = vmatpush1.bf16.msra.mxu0 %v1380
        %2048 = vmatprep.subr.bf16.mxu0 %v1385
        %2049 = vmatpush1.bf16.msra.mxu0 %v1384
        %2050 = vmatprep.subr.bf16.mxu0 %v1389
        %2051 = vmatpush1.bf16.msra.mxu0 %v1388
        %2052 = vmatprep.subr.bf16.mxu0 %v1393
        %2053 = vmatpush1.bf16.msra.mxu0 %v1392
        %2054 = vmatprep.subr.bf16.mxu0 %v1397
        %2055 = vmatpush1.bf16.msra.mxu0 %v1396
        %2056 = vmatprep.subr.bf16.mxu0 %v1401
        %2057 = vmatpush1.bf16.msra.mxu0 %v1400
        %2058 = vmatprep.subr.bf16.mxu0 %v1405
        %2059 = vmatpush1.bf16.msra.mxu0 %v1404
        %2060 = vmatprep.subr.bf16.mxu0 %v1409
        %2061 = vmatpush1.bf16.msra.mxu0 %v1408
        %2062 = vmatprep.subr.bf16.mxu0 %v1413
        %2063 = vmatpush1.bf16.msra.mxu0 %v1412
        %2064 = vmatprep.subr.bf16.mxu0 %v1417
        %2065 = vmatpush1.bf16.msra.mxu0 %v1416
        %2066 = vmatprep.subr.bf16.mxu0 %v1421
        %2067 = vmatpush1.bf16.msra.mxu0 %v1420
        %2068 = vmatprep.subr.bf16.mxu0 %v1425
        %2069 = vmatpush1.bf16.msra.mxu0 %v1424
        %2070 = vmatprep.mubr.bf16.mxu0 %v310
        %2071 = vmatmul.mubr.bf16.gmra.mrb[0].mxu0 %v309
        %v2072 = vpop.f32.mrb[0].mxu0
        %v2073 = vadd.f32 %v585, %v2072
        %v2074 = vpop.f32.mrb[0].mxu0
        %v2075 = vadd.f32 %v589, %v2074
        %v2076 = vpop.f32.mrb[0].mxu0
        %v2077 = vpop.f32.mrb[0].mxu0
        %2078 = vdwg.mxu0
        %2079 = vmatprep.subr.bf16.mxu0 %v1429
        %2080 = vmatpush1.bf16.msra.mxu0 %v1428
        %2081 = vmatprep.subr.bf16.mxu0 %v1433
        %2082 = vmatpush1.bf16.msra.mxu0 %v1432
        %2083 = vmatprep.subr.bf16.mxu0 %v1437
        %2084 = vmatpush1.bf16.msra.mxu0 %v1436
        %2085 = vmatprep.subr.bf16.mxu0 %v1441
        %2086 = vmatpush1.bf16.msra.mxu0 %v1440
        %2087 = vmatprep.subr.bf16.mxu0 %v1445
        %2088 = vmatpush1.bf16.msra.mxu0 %v1444
        %2089 = vmatprep.subr.bf16.mxu0 %v1449
        %2090 = vmatpush1.bf16.msra.mxu0 %v1448
        %2091 = vmatprep.subr.bf16.mxu0 %v1453
        %2092 = vmatpush1.bf16.msra.mxu0 %v1452
        %2093 = vmatprep.subr.bf16.mxu0 %v1457
        %2094 = vmatpush1.bf16.msra.mxu0 %v1456
        %2095 = vmatprep.subr.bf16.mxu0 %v1461
        %2096 = vmatpush1.bf16.msra.mxu0 %v1460
        %2097 = vmatprep.subr.bf16.mxu0 %v1465
        %2098 = vmatpush1.bf16.msra.mxu0 %v1464
        %2099 = vmatprep.subr.bf16.mxu0 %v1469
        %2100 = vmatpush1.bf16.msra.mxu0 %v1468
        %2101 = vmatprep.subr.bf16.mxu0 %v1473
        %2102 = vmatpush1.bf16.msra.mxu0 %v1472
        %2103 = vmatprep.subr.bf16.mxu0 %v1477
        %2104 = vmatpush1.bf16.msra.mxu0 %v1476
        %2105 = vmatprep.subr.bf16.mxu0 %v1481
        %2106 = vmatpush1.bf16.msra.mxu0 %v1480
        %2107 = vmatprep.subr.bf16.mxu0 %v1485
        %2108 = vmatpush1.bf16.msra.mxu0 %v1484
        %2109 = vmatprep.subr.bf16.mxu0 %v1489
        %2110 = vmatpush1.bf16.msra.mxu0 %v1488
        %2111 = vmatprep.mubr.bf16.mxu0 %v312
        %2112 = vmatmul.mubr.bf16.gmra.mrb[0].mxu0 %v311
        %v2113 = vpop.f32.mrb[0].mxu0
        %v2114 = vadd.f32 %v2073, %v2113
        %v2115 = vpop.f32.mrb[0].mxu0
        %v2116 = vadd.f32 %v2075, %v2115
        %v2117 = vpop.f32.mrb[0].mxu0
        %v2118 = vpop.f32.mrb[0].mxu0
        %2119 = vdwg.mxu0
        %2120 = vmatprep.subr.bf16.mxu0 %v1493
        %2121 = vmatpush1.bf16.msra.mxu0 %v1492
        %2122 = vmatprep.subr.bf16.mxu0 %v1497
        %2123 = vmatpush1.bf16.msra.mxu0 %v1496
        %2124 = vmatprep.subr.bf16.mxu0 %v1501
        %2125 = vmatpush1.bf16.msra.mxu0 %v1500
        %2126 = vmatprep.subr.bf16.mxu0 %v1505
        %2127 = vmatpush1.bf16.msra.mxu0 %v1504
        %2128 = vmatprep.subr.bf16.mxu0 %v1509
        %2129 = vmatpush1.bf16.msra.mxu0 %v1508
        %2130 = vmatprep.subr.bf16.mxu0 %v1513
        %2131 = vmatpush1.bf16.msra.mxu0 %v1512
        %2132 = vmatprep.subr.bf16.mxu0 %v1517
        %2133 = vmatpush1.bf16.msra.mxu0 %v1516
        %2134 = vmatprep.subr.bf16.mxu0 %v1521
        %2135 = vmatpush1.bf16.msra.mxu0 %v1520
        %2136 = vmatprep.subr.bf16.mxu0 %v1525
        %2137 = vmatpush1.bf16.msra.mxu0 %v1524
        %2138 = vmatprep.subr.bf16.mxu0 %v1529
        %2139 = vmatpush1.bf16.msra.mxu0 %v1528
        %2140 = vmatprep.subr.bf16.mxu0 %v1533
        %2141 = vmatpush1.bf16.msra.mxu0 %v1532
        %2142 = vmatprep.subr.bf16.mxu0 %v1537
        %2143 = vmatpush1.bf16.msra.mxu0 %v1536
        %2144 = vmatprep.subr.bf16.mxu0 %v1541
        %2145 = vmatpush1.bf16.msra.mxu0 %v1540
        %2146 = vmatprep.subr.bf16.mxu0 %v1545
        %2147 = vmatpush1.bf16.msra.mxu0 %v1544
        %2148 = vmatprep.subr.bf16.mxu0 %v1549
        %2149 = vmatpush1.bf16.msra.mxu0 %v1548
        %2150 = vmatprep.subr.bf16.mxu0 %v1553
        %2151 = vmatpush1.bf16.msra.mxu0 %v1552
        %2152 = vmatprep.mubr.bf16.mxu0 %v314
        %2153 = vmatmul.mubr.bf16.gmra.mrb[0].mxu0 %v313
        %v2154 = vpop.f32.mrb[0].mxu0
        %v2155 = vadd.f32 %v2114, %v2154
        %v2156 = vpop.f32.mrb[0].mxu0
        %v2157 = vadd.f32 %v2116, %v2156
        %v2158 = vpop.f32.mrb[0].mxu0
        %v2159 = vpop.f32.mrb[0].mxu0
        %2160 = vdwg.mxu0
        %2161 = vmatprep.subr.bf16.mxu0 %v1557
        %2162 = vmatpush1.bf16.msra.mxu0 %v1556
        %2163 = vmatprep.subr.bf16.mxu0 %v1561
        %2164 = vmatpush1.bf16.msra.mxu0 %v1560
        %2165 = vmatprep.subr.bf16.mxu0 %v1565
        %2166 = vmatpush1.bf16.msra.mxu0 %v1564
        %2167 = vmatprep.subr.bf16.mxu0 %v1569
        %2168 = vmatpush1.bf16.msra.mxu0 %v1568
        %2169 = vmatprep.subr.bf16.mxu0 %v1573
        %2170 = vmatpush1.bf16.msra.mxu0 %v1572
        %2171 = vmatprep.subr.bf16.mxu0 %v1577
        %2172 = vmatpush1.bf16.msra.mxu0 %v1576
        %2173 = vmatprep.subr.bf16.mxu0 %v1581
        %2174 = vmatpush1.bf16.msra.mxu0 %v1580
        %2175 = vmatprep.subr.bf16.mxu0 %v1585
        %2176 = vmatpush1.bf16.msra.mxu0 %v1584
        %2177 = vmatprep.subr.bf16.mxu0 %v1589
        %2178 = vmatpush1.bf16.msra.mxu0 %v1588
        %2179 = vmatprep.subr.bf16.mxu0 %v1593
        %2180 = vmatpush1.bf16.msra.mxu0 %v1592
        %2181 = vmatprep.subr.bf16.mxu0 %v1597
        %2182 = vmatpush1.bf16.msra.mxu0 %v1596
        %2183 = vmatprep.subr.bf16.mxu0 %v1601
        %2184 = vmatpush1.bf16.msra.mxu0 %v1600
        %2185 = vmatprep.subr.bf16.mxu0 %v1605
        %2186 = vmatpush1.bf16.msra.mxu0 %v1604
        %2187 = vmatprep.subr.bf16.mxu0 %v1609
        %2188 = vmatpush1.bf16.msra.mxu0 %v1608
        %2189 = vmatprep.subr.bf16.mxu0 %v1613
        %2190 = vmatpush1.bf16.msra.mxu0 %v1612
        %2191 = vmatprep.subr.bf16.mxu0 %v1617
        %2192 = vmatpush1.bf16.msra.mxu0 %v1616
        %2193 = vmatprep.mubr.bf16.mxu0 %v316
        %2194 = vmatmul.mubr.bf16.gmra.mrb[0].mxu0 %v315
        %v2195 = vpop.f32.mrb[0].mxu0
        %v2196 = vadd.f32 %v2155, %v2195
        %v2197 = vpop.f32.mrb[0].mxu0
        %v2198 = vadd.f32 %v2157, %v2197
        %v2199 = vpop.f32.mrb[0].mxu0
        %v2200 = vpop.f32.mrb[0].mxu0
        %2201 = vdwg.mxu0
        %v2202 = vmax.f32 %v2032, 0.0
        %v2203 = vmax.f32 %v2034, 0.0
        %v2204 = vmax.f32 %v2196, 0.0
        %v2205 = vmax.f32 %v2198, 0.0
        %v2206 = vpack.c.bf16 %v2202, %v2202
        %v2207 = vpack.c.bf16 %v2203, %v2203
        %v2208 = vpack.c.bf16 %v2204, %v2204
        %v2209 = vpack.c.bf16 %v2205, %v2205
        %v2210 = vld [vmem:[#allocation7] sm:$0xff]
        %v2211 = vld [vmem:[#allocation7 + $0x8] sm:$0xff]
        %v2212 = vld [vmem:[#allocation7 + $0x10] sm:$0xff]
        %v2213 = vld [vmem:[#allocation7 + $0x18] sm:$0xff]
        %v2214 = vld [vmem:[#allocation7 + $0x20] sm:$0xff]
        %v2215 = vld [vmem:[#allocation7 + $0x28] sm:$0xff]
        %v2216 = vld [vmem:[#allocation7 + $0x30] sm:$0xff]
        %v2217 = vld [vmem:[#allocation7 + $0x38] sm:$0xff]
        %v2218 = vld [vmem:[#allocation7 + $0x40] sm:$0xff]
        %v2219 = vld [vmem:[#allocation7 + $0x48] sm:$0xff]
        %v2220 = vld [vmem:[#allocation7 + $0x50] sm:$0xff]
        %v2221 = vld [vmem:[#allocation7 + $0x58] sm:$0xff]
        %v2222 = vld [vmem:[#allocation7 + $0x60] sm:$0xff]
        %v2223 = vld [vmem:[#allocation7 + $0x68] sm:$0xff]
        %v2224 = vld [vmem:[#allocation7 + $0x70] sm:$0xff]
        %v2225 = vld [vmem:[#allocation7 + $0x78] sm:$0xff]
        %v2226 = vld [vmem:[#allocation7 + $0x80] sm:$0xff]
        %v2227 = vld [vmem:[#allocation7 + $0x88] sm:$0xff]
        %v2228 = vld [vmem:[#allocation7 + $0x90] sm:$0xff]
        %v2229 = vld [vmem:[#allocation7 + $0x98] sm:$0xff]
        %v2230 = vld [vmem:[#allocation7 + $0xa0] sm:$0xff]
        %v2231 = vld [vmem:[#allocation7 + $0xa8] sm:$0xff]
        %v2232 = vld [vmem:[#allocation7 + $0xb0] sm:$0xff]
        %v2233 = vld [vmem:[#allocation7 + $0xb8] sm:$0xff]
        %v2234 = vld [vmem:[#allocation7 + $0xc0] sm:$0xff]
        %v2235 = vld [vmem:[#allocation7 + $0xc8] sm:$0xff]
        %v2236 = vld [vmem:[#allocation7 + $0xd0] sm:$0xff]
        %v2237 = vld [vmem:[#allocation7 + $0xd8] sm:$0xff]
        %v2238 = vld [vmem:[#allocation7 + $0xe0] sm:$0xff]
        %v2239 = vld [vmem:[#allocation7 + $0xe8] sm:$0xff]
        %v2240 = vld [vmem:[#allocation7 + $0xf0] sm:$0xff]
        %v2241 = vld [vmem:[#allocation7 + $0xf8] sm:$0xff]
        %v2242 = vld [vmem:[#allocation7 + $0x100] sm:$0xff]
        %v2243 = vld [vmem:[#allocation7 + $0x108] sm:$0xff]
        %v2244 = vld [vmem:[#allocation7 + $0x110] sm:$0xff]
        %v2245 = vld [vmem:[#allocation7 + $0x118] sm:$0xff]
        %v2246 = vld [vmem:[#allocation7 + $0x120] sm:$0xff]
        %v2247 = vld [vmem:[#allocation7 + $0x128] sm:$0xff]
        %v2248 = vld [vmem:[#allocation7 + $0x130] sm:$0xff]
        %v2249 = vld [vmem:[#allocation7 + $0x138] sm:$0xff]
        %v2250 = vld [vmem:[#allocation7 + $0x140] sm:$0xff]
        %v2251 = vld [vmem:[#allocation7 + $0x148] sm:$0xff]
        %v2252 = vld [vmem:[#allocation7 + $0x150] sm:$0xff]
        %v2253 = vld [vmem:[#allocation7 + $0x158] sm:$0xff]
        %v2254 = vld [vmem:[#allocation7 + $0x160] sm:$0xff]
        %v2255 = vld [vmem:[#allocation7 + $0x168] sm:$0xff]
        %v2256 = vld [vmem:[#allocation7 + $0x170] sm:$0xff]
        %v2257 = vld [vmem:[#allocation7 + $0x178] sm:$0xff]
        %v2258 = vld [vmem:[#allocation7 + $0x180] sm:$0xff]
        %v2259 = vld [vmem:[#allocation7 + $0x188] sm:$0xff]
        %v2260 = vld [vmem:[#allocation7 + $0x190] sm:$0xff]
        %v2261 = vld [vmem:[#allocation7 + $0x198] sm:$0xff]
        %v2262 = vld [vmem:[#allocation7 + $0x1a0] sm:$0xff]
        %v2263 = vld [vmem:[#allocation7 + $0x1a8] sm:$0xff]
        %v2264 = vld [vmem:[#allocation7 + $0x1b0] sm:$0xff]
        %v2265 = vld [vmem:[#allocation7 + $0x1b8] sm:$0xff]
        %v2266 = vld [vmem:[#allocation7 + $0x1c0] sm:$0xff]
        %v2267 = vld [vmem:[#allocation7 + $0x1c8] sm:$0xff]
        %v2268 = vld [vmem:[#allocation7 + $0x1d0] sm:$0xff]
        %v2269 = vld [vmem:[#allocation7 + $0x1d8] sm:$0xff]
        %v2270 = vld [vmem:[#allocation7 + $0x1e0] sm:$0xff]
        %v2271 = vld [vmem:[#allocation7 + $0x1e8] sm:$0xff]
        %v2272 = vld [vmem:[#allocation7 + $0x1f0] sm:$0xff]
        %v2273 = vld [vmem:[#allocation7 + $0x1f8] sm:$0xff]
        %v2275 = vlaneseq
        %v2276 = vshrl.u32 %v2275, 7
        %v2277 = vsub.s32 0, %v2276
        %v2278 = vrot.slane %v299, %v2277
        %v2279 = vlaneseq
        %v2280 = vshrl.u32 %v2279, 7
        %v2281 = vsub.s32 1, %v2280
        %v2282 = vrot.slane %v299, %v2281
        %v2349 = vunpack.c.l.b16 %v2210
        %v2350 = vunpack.c.h.b16 %v2210
        %v2351 = vunpack.c.l.b16 %v2211
        %v2352 = vunpack.c.h.b16 %v2211
        %v2353 = vunpack.c.l.b16 %v2212
        %v2354 = vunpack.c.h.b16 %v2212
        %v2355 = vunpack.c.l.b16 %v2213
        %v2356 = vunpack.c.h.b16 %v2213
        %v2357 = vunpack.c.l.b16 %v2214
        %v2358 = vunpack.c.h.b16 %v2214
        %v2359 = vunpack.c.l.b16 %v2215
        %v2360 = vunpack.c.h.b16 %v2215
        %v2361 = vunpack.c.l.b16 %v2216
        %v2362 = vunpack.c.h.b16 %v2216
        %v2363 = vunpack.c.l.b16 %v2217
        %v2364 = vunpack.c.h.b16 %v2217
        %v2365 = vunpack.c.l.b16 %v2218
        %v2366 = vunpack.c.h.b16 %v2218
        %v2367 = vunpack.c.l.b16 %v2219
        %v2368 = vunpack.c.h.b16 %v2219
        %v2369 = vunpack.c.l.b16 %v2220
        %v2370 = vunpack.c.h.b16 %v2220
        %v2371 = vunpack.c.l.b16 %v2221
        %v2372 = vunpack.c.h.b16 %v2221
        %v2373 = vunpack.c.l.b16 %v2222
        %v2374 = vunpack.c.h.b16 %v2222
        %v2375 = vunpack.c.l.b16 %v2223
        %v2376 = vunpack.c.h.b16 %v2223
        %v2377 = vunpack.c.l.b16 %v2224
        %v2378 = vunpack.c.h.b16 %v2224
        %v2379 = vunpack.c.l.b16 %v2225
        %v2380 = vunpack.c.h.b16 %v2225
        %v2381 = vunpack.c.l.b16 %v2226
        %v2382 = vunpack.c.h.b16 %v2226
        %v2383 = vunpack.c.l.b16 %v2227
        %v2384 = vunpack.c.h.b16 %v2227
        %v2385 = vunpack.c.l.b16 %v2228
        %v2386 = vunpack.c.h.b16 %v2228
        %v2387 = vunpack.c.l.b16 %v2229
        %v2388 = vunpack.c.h.b16 %v2229
        %v2389 = vunpack.c.l.b16 %v2230
        %v2390 = vunpack.c.h.b16 %v2230
        %v2391 = vunpack.c.l.b16 %v2231
        %v2392 = vunpack.c.h.b16 %v2231
        %v2393 = vunpack.c.l.b16 %v2232
        %v2394 = vunpack.c.h.b16 %v2232
        %v2395 = vunpack.c.l.b16 %v2233
        %v2396 = vunpack.c.h.b16 %v2233
        %v2397 = vunpack.c.l.b16 %v2234
        %v2398 = vunpack.c.h.b16 %v2234
        %v2399 = vunpack.c.l.b16 %v2235
        %v2400 = vunpack.c.h.b16 %v2235
        %v2401 = vunpack.c.l.b16 %v2236
        %v2402 = vunpack.c.h.b16 %v2236
        %v2403 = vunpack.c.l.b16 %v2237
        %v2404 = vunpack.c.h.b16 %v2237
        %v2405 = vunpack.c.l.b16 %v2238
        %v2406 = vunpack.c.h.b16 %v2238
        %v2407 = vunpack.c.l.b16 %v2239
        %v2408 = vunpack.c.h.b16 %v2239
        %v2409 = vunpack.c.l.b16 %v2240
        %v2410 = vunpack.c.h.b16 %v2240
        %v2411 = vunpack.c.l.b16 %v2241
        %v2412 = vunpack.c.h.b16 %v2241
        %v2413 = vunpack.c.l.b16 %v2242
        %v2414 = vunpack.c.h.b16 %v2242
        %v2415 = vunpack.c.l.b16 %v2243
        %v2416 = vunpack.c.h.b16 %v2243
        %v2417 = vunpack.c.l.b16 %v2244
        %v2418 = vunpack.c.h.b16 %v2244
        %v2419 = vunpack.c.l.b16 %v2245
        %v2420 = vunpack.c.h.b16 %v2245
        %v2421 = vunpack.c.l.b16 %v2246
        %v2422 = vunpack.c.h.b16 %v2246
        %v2423 = vunpack.c.l.b16 %v2247
        %v2424 = vunpack.c.h.b16 %v2247
        %v2425 = vunpack.c.l.b16 %v2248
        %v2426 = vunpack.c.h.b16 %v2248
        %v2427 = vunpack.c.l.b16 %v2249
        %v2428 = vunpack.c.h.b16 %v2249
        %v2429 = vunpack.c.l.b16 %v2250
        %v2430 = vunpack.c.h.b16 %v2250
        %v2431 = vunpack.c.l.b16 %v2251
        %v2432 = vunpack.c.h.b16 %v2251
        %v2433 = vunpack.c.l.b16 %v2252
        %v2434 = vunpack.c.h.b16 %v2252
        %v2435 = vunpack.c.l.b16 %v2253
        %v2436 = vunpack.c.h.b16 %v2253
        %v2437 = vunpack.c.l.b16 %v2254
        %v2438 = vunpack.c.h.b16 %v2254
        %v2439 = vunpack.c.l.b16 %v2255
        %v2440 = vunpack.c.h.b16 %v2255
        %v2441 = vunpack.c.l.b16 %v2256
        %v2442 = vunpack.c.h.b16 %v2256
        %v2443 = vunpack.c.l.b16 %v2257
        %v2444 = vunpack.c.h.b16 %v2257
        %v2445 = vunpack.c.l.b16 %v2258
        %v2446 = vunpack.c.h.b16 %v2258
        %v2447 = vunpack.c.l.b16 %v2259
        %v2448 = vunpack.c.h.b16 %v2259
        %v2449 = vunpack.c.l.b16 %v2260
        %v2450 = vunpack.c.h.b16 %v2260
        %v2451 = vunpack.c.l.b16 %v2261
        %v2452 = vunpack.c.h.b16 %v2261
        %v2453 = vunpack.c.l.b16 %v2262
        %v2454 = vunpack.c.h.b16 %v2262
        %v2455 = vunpack.c.l.b16 %v2263
        %v2456 = vunpack.c.h.b16 %v2263
        %v2457 = vunpack.c.l.b16 %v2264
        %v2458 = vunpack.c.h.b16 %v2264
        %v2459 = vunpack.c.l.b16 %v2265
        %v2460 = vunpack.c.h.b16 %v2265
        %v2461 = vunpack.c.l.b16 %v2266
        %v2462 = vunpack.c.h.b16 %v2266
        %v2463 = vunpack.c.l.b16 %v2267
        %v2464 = vunpack.c.h.b16 %v2267
        %v2465 = vunpack.c.l.b16 %v2268
        %v2466 = vunpack.c.h.b16 %v2268
        %v2467 = vunpack.c.l.b16 %v2269
        %v2468 = vunpack.c.h.b16 %v2269
        %v2469 = vunpack.c.l.b16 %v2270
        %v2470 = vunpack.c.h.b16 %v2270
        %v2471 = vunpack.c.l.b16 %v2271
        %v2472 = vunpack.c.h.b16 %v2271
        %v2473 = vunpack.c.l.b16 %v2272
        %v2474 = vunpack.c.h.b16 %v2272
        %v2475 = vunpack.c.l.b16 %v2273
        %v2476 = vunpack.c.h.b16 %v2273
        %v2477 = vpack.c.b16 %v2351, %v2349
        %v2478 = vpack.c.b16 %v2352, %v2350
        %v2479 = vpack.c.b16 %v2355, %v2353
        %v2480 = vpack.c.b16 %v2356, %v2354
        %v2481 = vpack.c.b16 %v2359, %v2357
        %v2482 = vpack.c.b16 %v2360, %v2358
        %v2483 = vpack.c.b16 %v2363, %v2361
        %v2484 = vpack.c.b16 %v2364, %v2362
        %v2485 = vpack.c.b16 %v2367, %v2365
        %v2486 = vpack.c.b16 %v2368, %v2366
        %v2487 = vpack.c.b16 %v2371, %v2369
        %v2488 = vpack.c.b16 %v2372, %v2370
        %v2489 = vpack.c.b16 %v2375, %v2373
        %v2490 = vpack.c.b16 %v2376, %v2374
        %v2491 = vpack.c.b16 %v2379, %v2377
        %v2492 = vpack.c.b16 %v2380, %v2378
        %v2493 = vpack.c.b16 %v2383, %v2381
        %v2494 = vpack.c.b16 %v2384, %v2382
        %v2495 = vpack.c.b16 %v2387, %v2385
        %v2496 = vpack.c.b16 %v2388, %v2386
        %v2497 = vpack.c.b16 %v2391, %v2389
        %v2498 = vpack.c.b16 %v2392, %v2390
        %v2499 = vpack.c.b16 %v2395, %v2393
        %v2500 = vpack.c.b16 %v2396, %v2394
        %v2501 = vpack.c.b16 %v2399, %v2397
        %v2502 = vpack.c.b16 %v2400, %v2398
        %v2503 = vpack.c.b16 %v2403, %v2401
        %v2504 = vpack.c.b16 %v2404, %v2402
        %v2505 = vpack.c.b16 %v2407, %v2405
        %v2506 = vpack.c.b16 %v2408, %v2406
        %v2507 = vpack.c.b16 %v2411, %v2409
        %v2508 = vpack.c.b16 %v2412, %v2410
        %v2509 = vpack.c.b16 %v2415, %v2413
        %v2510 = vpack.c.b16 %v2416, %v2414
        %v2511 = vpack.c.b16 %v2419, %v2417
        %v2512 = vpack.c.b16 %v2420, %v2418
        %v2513 = vpack.c.b16 %v2423, %v2421
        %v2514 = vpack.c.b16 %v2424, %v2422
        %v2515 = vpack.c.b16 %v2427, %v2425
        %v2516 = vpack.c.b16 %v2428, %v2426
        %v2517 = vpack.c.b16 %v2431, %v2429
        %v2518 = vpack.c.b16 %v2432, %v2430
        %v2519 = vpack.c.b16 %v2435, %v2433
        %v2520 = vpack.c.b16 %v2436, %v2434
        %v2521 = vpack.c.b16 %v2439, %v2437
        %v2522 = vpack.c.b16 %v2440, %v2438
        %v2523 = vpack.c.b16 %v2443, %v2441
        %v2524 = vpack.c.b16 %v2444, %v2442
        %v2525 = vpack.c.b16 %v2447, %v2445
        %v2526 = vpack.c.b16 %v2448, %v2446
        %v2527 = vpack.c.b16 %v2451, %v2449
        %v2528 = vpack.c.b16 %v2452, %v2450
        %v2529 = vpack.c.b16 %v2455, %v2453
        %v2530 = vpack.c.b16 %v2456, %v2454
        %v2531 = vpack.c.b16 %v2459, %v2457
        %v2532 = vpack.c.b16 %v2460, %v2458
        %v2533 = vpack.c.b16 %v2463, %v2461
        %v2534 = vpack.c.b16 %v2464, %v2462
        %v2535 = vpack.c.b16 %v2467, %v2465
        %v2536 = vpack.c.b16 %v2468, %v2466
        %v2537 = vpack.c.b16 %v2471, %v2469
        %v2538 = vpack.c.b16 %v2472, %v2470
        %v2539 = vpack.c.b16 %v2475, %v2473
        %v2540 = vpack.c.b16 %v2476, %v2474
        %2605 = vmatprep.subr.bf16.mxu0 %v2478
        %2606 = vmatpush1.bf16.msra.mxu0 %v2477
        %2607 = vmatprep.subr.bf16.mxu0 %v2480
        %2608 = vmatpush1.bf16.msra.mxu0 %v2479
        %2609 = vmatprep.subr.bf16.mxu0 %v2482
        %2610 = vmatpush1.bf16.msra.mxu0 %v2481
        %2611 = vmatprep.subr.bf16.mxu0 %v2484
        %2612 = vmatpush1.bf16.msra.mxu0 %v2483
        %2613 = vmatprep.subr.bf16.mxu0 %v2486
        %2614 = vmatpush1.bf16.msra.mxu0 %v2485
        %2615 = vmatprep.subr.bf16.mxu0 %v2488
        %2616 = vmatpush1.bf16.msra.mxu0 %v2487
        %2617 = vmatprep.subr.bf16.mxu0 %v2490
        %2618 = vmatpush1.bf16.msra.mxu0 %v2489
        %2619 = vmatprep.subr.bf16.mxu0 %v2492
        %2620 = vmatpush1.bf16.msra.mxu0 %v2491
        %2621 = vmatprep.subr.bf16.mxu0 %v2494
        %2622 = vmatpush1.bf16.msra.mxu0 %v2493
        %2623 = vmatprep.subr.bf16.mxu0 %v2496
        %2624 = vmatpush1.bf16.msra.mxu0 %v2495
        %2625 = vmatprep.subr.bf16.mxu0 %v2498
        %2626 = vmatpush1.bf16.msra.mxu0 %v2497
        %2627 = vmatprep.subr.bf16.mxu0 %v2500
        %2628 = vmatpush1.bf16.msra.mxu0 %v2499
        %2629 = vmatprep.subr.bf16.mxu0 %v2502
        %2630 = vmatpush1.bf16.msra.mxu0 %v2501
        %2631 = vmatprep.subr.bf16.mxu0 %v2504
        %2632 = vmatpush1.bf16.msra.mxu0 %v2503
        %2633 = vmatprep.subr.bf16.mxu0 %v2506
        %2634 = vmatpush1.bf16.msra.mxu0 %v2505
        %2635 = vmatprep.subr.bf16.mxu0 %v2508
        %2636 = vmatpush1.bf16.msra.mxu0 %v2507
        %2637 = vmatprep.mubr.bf16.mxu0 %v2207
        %2638 = vmatmul.mubr.bf16.gmra.mrb[0].mxu0 %v2206
        %v2639 = vpop.f32.mrb[0].mxu0
        %v2640 = vadd.f32 %v2278, %v2639
        %v2641 = vpop.f32.mrb[0].mxu0
        %v2642 = vadd.f32 %v2282, %v2641
        %v2643 = vpop.f32.mrb[0].mxu0
        %v2644 = vpop.f32.mrb[0].mxu0
        %2645 = vdwg.mxu0
        %2646 = vmatprep.subr.bf16.mxu0 %v2510
        %2647 = vmatpush1.bf16.msra.mxu0 %v2509
        %2648 = vmatprep.subr.bf16.mxu0 %v2512
        %2649 = vmatpush1.bf16.msra.mxu0 %v2511
        %2650 = vmatprep.subr.bf16.mxu0 %v2514
        %2651 = vmatpush1.bf16.msra.mxu0 %v2513
        %2652 = vmatprep.subr.bf16.mxu0 %v2516
        %2653 = vmatpush1.bf16.msra.mxu0 %v2515
        %2654 = vmatprep.subr.bf16.mxu0 %v2518
        %2655 = vmatpush1.bf16.msra.mxu0 %v2517
        %2656 = vmatprep.subr.bf16.mxu0 %v2520
        %2657 = vmatpush1.bf16.msra.mxu0 %v2519
        %2658 = vmatprep.subr.bf16.mxu0 %v2522
        %2659 = vmatpush1.bf16.msra.mxu0 %v2521
        %2660 = vmatprep.subr.bf16.mxu0 %v2524
        %2661 = vmatpush1.bf16.msra.mxu0 %v2523
        %2662 = vmatprep.subr.bf16.mxu0 %v2526
        %2663 = vmatpush1.bf16.msra.mxu0 %v2525
        %2664 = vmatprep.subr.bf16.mxu0 %v2528
        %2665 = vmatpush1.bf16.msra.mxu0 %v2527
        %2666 = vmatprep.subr.bf16.mxu0 %v2530
        %2667 = vmatpush1.bf16.msra.mxu0 %v2529
        %2668 = vmatprep.subr.bf16.mxu0 %v2532
        %2669 = vmatpush1.bf16.msra.mxu0 %v2531
        %2670 = vmatprep.subr.bf16.mxu0 %v2534
        %2671 = vmatpush1.bf16.msra.mxu0 %v2533
        %2672 = vmatprep.subr.bf16.mxu0 %v2536
        %2673 = vmatpush1.bf16.msra.mxu0 %v2535
        %2674 = vmatprep.subr.bf16.mxu0 %v2538
        %2675 = vmatpush1.bf16.msra.mxu0 %v2537
        %2676 = vmatprep.subr.bf16.mxu0 %v2540
        %2677 = vmatpush1.bf16.msra.mxu0 %v2539
        %2678 = vmatprep.mubr.bf16.mxu0 %v2209
        %2679 = vmatmul.mubr.bf16.gmra.mrb[0].mxu0 %v2208
        %v2680 = vpop.f32.mrb[0].mxu0
        %v2681 = vadd.f32 %v2640, %v2680
        %v2682 = vpop.f32.mrb[0].mxu0
        %v2683 = vadd.f32 %v2642, %v2682
        %v2684 = vpop.f32.mrb[0].mxu0
        %v2685 = vpop.f32.mrb[0].mxu0
        %2686 = vdwg.mxu0
        %v2687 = vmax.f32 %v2681, 0.0
        %v2688 = vmax.f32 %v2683, 0.0
        %v2689 = vpack.c.bf16 %v2687, %v2687
        %v2690 = vpack.c.bf16 %v2688, %v2688
        %v2691 = vld [vmem:[#allocation8] sm:$0xf]
        %v2692 = vld [vmem:[#allocation8 + $0x4] sm:$0xf]
        %v2693 = vld [vmem:[#allocation8 + $0x8] sm:$0xf]
        %v2694 = vld [vmem:[#allocation8 + $0xc] sm:$0xf]
        %v2695 = vld [vmem:[#allocation8 + $0x10] sm:$0xf]
        %v2696 = vld [vmem:[#allocation8 + $0x14] sm:$0xf]
        %v2697 = vld [vmem:[#allocation8 + $0x18] sm:$0xf]
        %v2698 = vld [vmem:[#allocation8 + $0x1c] sm:$0xf]
        %v2699 = vld [vmem:[#allocation8 + $0x20] sm:$0xf]
        %v2700 = vld [vmem:[#allocation8 + $0x24] sm:$0xf]
        %v2701 = vld [vmem:[#allocation8 + $0x28] sm:$0xf]
        %v2702 = vld [vmem:[#allocation8 + $0x2c] sm:$0xf]
        %v2703 = vld [vmem:[#allocation8 + $0x30] sm:$0xf]
        %v2704 = vld [vmem:[#allocation8 + $0x34] sm:$0xf]
        %v2705 = vld [vmem:[#allocation8 + $0x38] sm:$0xf]
        %v2706 = vld [vmem:[#allocation8 + $0x3c] sm:$0xf]
        %v2707 = vld [vmem:[#allocation8 + $0x40] sm:$0xf]
        %v2708 = vld [vmem:[#allocation8 + $0x44] sm:$0xf]
        %v2709 = vld [vmem:[#allocation8 + $0x48] sm:$0xf]
        %v2710 = vld [vmem:[#allocation8 + $0x4c] sm:$0xf]
        %v2711 = vld [vmem:[#allocation8 + $0x50] sm:$0xf]
        %v2712 = vld [vmem:[#allocation8 + $0x54] sm:$0xf]
        %v2713 = vld [vmem:[#allocation8 + $0x58] sm:$0xf]
        %v2714 = vld [vmem:[#allocation8 + $0x5c] sm:$0xf]
        %v2715 = vld [vmem:[#allocation8 + $0x60] sm:$0xf]
        %v2716 = vld [vmem:[#allocation8 + $0x64] sm:$0xf]
        %v2717 = vld [vmem:[#allocation8 + $0x68] sm:$0xf]
        %v2718 = vld [vmem:[#allocation8 + $0x6c] sm:$0xf]
        %v2719 = vld [vmem:[#allocation8 + $0x70] sm:$0xf]
        %v2720 = vld [vmem:[#allocation8 + $0x74] sm:$0xf]
        %v2721 = vld [vmem:[#allocation8 + $0x78] sm:$0xf]
        %v2722 = vld [vmem:[#allocation8 + $0x7c] sm:$0xf]
        %v2724 = vlaneseq
        %v2725 = vshrl.u32 %v2724, 7
        %v2726 = vsub.s32 0, %v2725
        %v2727 = vrot.slane %v300, %v2726
        %v2761 = vunpack.c.l.b16 %v2691
        %v2762 = vunpack.c.l.b16 %v2692
        %v2763 = vunpack.c.l.b16 %v2693
        %v2764 = vunpack.c.l.b16 %v2694
        %v2765 = vunpack.c.l.b16 %v2695
        %v2766 = vunpack.c.l.b16 %v2696
        %v2767 = vunpack.c.l.b16 %v2697
        %v2768 = vunpack.c.l.b16 %v2698
        %v2769 = vunpack.c.l.b16 %v2699
        %v2770 = vunpack.c.l.b16 %v2700
        %v2771 = vunpack.c.l.b16 %v2701
        %v2772 = vunpack.c.l.b16 %v2702
        %v2773 = vunpack.c.l.b16 %v2703
        %v2774 = vunpack.c.l.b16 %v2704
        %v2775 = vunpack.c.l.b16 %v2705
        %v2776 = vunpack.c.l.b16 %v2706
        %v2777 = vunpack.c.l.b16 %v2707
        %v2778 = vunpack.c.l.b16 %v2708
        %v2779 = vunpack.c.l.b16 %v2709
        %v2780 = vunpack.c.l.b16 %v2710
        %v2781 = vunpack.c.l.b16 %v2711
        %v2782 = vunpack.c.l.b16 %v2712
        %v2783 = vunpack.c.l.b16 %v2713
        %v2784 = vunpack.c.l.b16 %v2714
        %v2785 = vunpack.c.l.b16 %v2715
        %v2786 = vunpack.c.l.b16 %v2716
        %v2787 = vunpack.c.l.b16 %v2717
        %v2788 = vunpack.c.l.b16 %v2718
        %v2789 = vunpack.c.l.b16 %v2719
        %v2790 = vunpack.c.l.b16 %v2720
        %v2791 = vunpack.c.l.b16 %v2721
        %v2792 = vunpack.c.l.b16 %v2722
        %v2793 = vpack.c.b16 %v2762, %v2761
        %v2794 = vpack.c.b16 %v2764, %v2763
        %v2795 = vpack.c.b16 %v2766, %v2765
        %v2796 = vpack.c.b16 %v2768, %v2767
        %v2797 = vpack.c.b16 %v2770, %v2769
        %v2798 = vpack.c.b16 %v2772, %v2771
        %v2799 = vpack.c.b16 %v2774, %v2773
        %v2800 = vpack.c.b16 %v2776, %v2775
        %v2801 = vpack.c.b16 %v2778, %v2777
        %v2802 = vpack.c.b16 %v2780, %v2779
        %v2803 = vpack.c.b16 %v2782, %v2781
        %v2804 = vpack.c.b16 %v2784, %v2783
        %v2805 = vpack.c.b16 %v2786, %v2785
        %v2806 = vpack.c.b16 %v2788, %v2787
        %v2807 = vpack.c.b16 %v2790, %v2789
        %v2808 = vpack.c.b16 %v2792, %v2791
        %2825 = vmatprep.subr.bf16.mxu0 0
        %2826 = vmatpush1.bf16.msra.mxu0 %v2793
        %2827 = vmatprep.subr.bf16.mxu0 0
        %2828 = vmatpush1.bf16.msra.mxu0 %v2794
        %2829 = vmatprep.subr.bf16.mxu0 0
        %2830 = vmatpush1.bf16.msra.mxu0 %v2795
        %2831 = vmatprep.subr.bf16.mxu0 0
        %2832 = vmatpush1.bf16.msra.mxu0 %v2796
        %2833 = vmatprep.subr.bf16.mxu0 0
        %2834 = vmatpush1.bf16.msra.mxu0 %v2797
        %2835 = vmatprep.subr.bf16.mxu0 0
        %2836 = vmatpush1.bf16.msra.mxu0 %v2798
        %2837 = vmatprep.subr.bf16.mxu0 0
        %2838 = vmatpush1.bf16.msra.mxu0 %v2799
        %2839 = vmatprep.subr.bf16.mxu0 0
        %2840 = vmatpush1.bf16.msra.mxu0 %v2800
        %2841 = vmatprep.subr.bf16.mxu0 0
        %2842 = vmatpush1.bf16.msra.mxu0 %v2801
        %2843 = vmatprep.subr.bf16.mxu0 0
        %2844 = vmatpush1.bf16.msra.mxu0 %v2802
        %2845 = vmatprep.subr.bf16.mxu0 0
        %2846 = vmatpush1.bf16.msra.mxu0 %v2803
        %2847 = vmatprep.subr.bf16.mxu0 0
        %2848 = vmatpush1.bf16.msra.mxu0 %v2804
        %2849 = vmatprep.subr.bf16.mxu0 0
        %2850 = vmatpush1.bf16.msra.mxu0 %v2805
        %2851 = vmatprep.subr.bf16.mxu0 0
        %2852 = vmatpush1.bf16.msra.mxu0 %v2806
        %2853 = vmatprep.subr.bf16.mxu0 0
        %2854 = vmatpush1.bf16.msra.mxu0 %v2807
        %2855 = vmatprep.subr.bf16.mxu0 0
        %2856 = vmatpush1.bf16.msra.mxu0 %v2808
        %2857 = vmatprep.mubr.bf16.mxu0 %v2690
        %2858 = vmatmul.mubr.bf16.gmra.mrb[0].mxu0 %v2689
        %v2859 = vpop.f32.mrb[0].mxu0
        %v2860 = vadd.f32 %v2727, %v2859
        %v2861 = vpop.f32.mrb[0].mxu0
        %v2862 = vpop.f32.mrb[0].mxu0
        %v2863 = vpop.f32.mrb[0].mxu0
        %2864 = vdwg.mxu0
        %2865 = vst [vmem:[%s296] sm:$0xff] %v2860
        %s2866 = sand.u32 %s142, 1
        %s2867 = scalar_lea.sflag [#allocation4], %s2866
        %s2868 = sand.u32 %s142, 1
        %s2869 = smul.addr %s2868, 8
        %s2870 = scalar_lea.vmem [#allocation11], %s2869
        // Predicated region
        $region61: #{pointnet2_cls_classifier.1} parent=39 // pred_check
          %p2871 = pneg %p152
        $region62: #{pointnet2_cls_classifier.1} parent=39 // pred_check_branch
          %2873 = sbr.rel (%p2871) target = $region64
        $region63: #{pointnet2_cls_classifier.1} parent=39 // pred_region
          %s2875 = ssub.s32 128, 128
          %2876 = vsyncadd %s2867, %s2875
          %s2877 = smul.addr %s24, 128
          %s2878 = scalar_lea.hbm %s5, %s2877
          %s2880 = sshll.u32 %s2870, 4
          %s2881 = int_to_ptr.vmem [resolvable:$true] %s2880
          %2883 = dma.vmem_to_hbm [thread:$0]  %s2881, 128, %s2878, %s2867
        $region64: #{pointnet2_cls_classifier.1} parent=39 // pred_fallthru
          _
      $region40: #{pointnet2_cls_classifier.1} parent=5 // pred_fallthru
        _
      %p2884 = scmp.le.s32.totalorder 2, %s19
      // Predicated region
      $region65: #{pointnet2_cls_classifier.1} parent=5 // pred_check
        %p2885 = pneg %p2884
      $region66: #{pointnet2_cls_classifier.1} parent=5 // pred_check_branch
        %2887 = sbr.rel (%p2885) target = $region68
      $region67: #{pointnet2_cls_classifier.1} parent=5 // pred_region
        %s2888 = ssub.s32 %s19, 2
        // Predicated region
        $region69: #{pointnet2_cls_classifier.1} parent=67 // pred_check
          %p2889 = pneg %p158
        $region70: #{pointnet2_cls_classifier.1} parent=67 // pred_check_branch
          %2891 = sbr.rel (%p2889) target = $region72
        $region71: #{pointnet2_cls_classifier.1} parent=67 // pred_region
          %s2892 = sand.u32 %s143, 1
          %s2893 = scalar_lea.sflag [#allocation4], %s2892
          %s2894 = sand.u32 %s143, 1
          %s2895 = smul.addr %s2894, 8
          %s2896 = scalar_lea.vmem [#allocation11], %s2895
          %2897 = dma.done %s2893, 128
        $region72: #{pointnet2_cls_classifier.1} parent=67 // pred_fallthru
          _
      $region68: #{pointnet2_cls_classifier.1} parent=5 // pred_fallthru
        _
    $region6: #{pointnet2_cls_classifier.1} parent=1 // loop_footer
      %s23 = sadd.s32 1, %s19
    $region7: #{pointnet2_cls_classifier.1} parent=1 // loop_footer_branch
      %18 = sbr.rel target = $region3
    $region8: #{pointnet2_cls_classifier.1} parent=1 // loop_exit
      _
    %2898 = vsyncpa [#allocation3], 1
    %s2899 = scalar_lea.sflag [#allocation3], 1
    %2900 = vsyncpa %s2899, 1
    %2901 = vsyncpa [#allocation6], 1
    %2902 = vsyncpa [#allocation9], 1
    %2903 = vsyncpa [#allocation4], 1
    %s2904 = scalar_lea.sflag [#allocation4], 1
    %2905 = vsyncpa %s2904, 1

</llo_original>
